<compile_context>
chip_gen: v6e
topology: v6e:2x2x1
jax: 0.10.0
libtpu: 0.0.40
codegen_flags: <defaults>
</compile_context>

<pallas_src>
import math
from functools import partial

import jax
import jax.numpy as jnp
from jax.experimental import pallas as pl
from jax.experimental.pallas import tpu as pltpu


# ----------------------- fused layer-stack (+ final LayerNorm) kernel -----------------------

def orchid_stack_kernel(x_ref, in_w_ref, in_b_ref, sfw_ref, sfb_ref, h_ref, hb_ref,
                        out_w_ref, out_b_ref, ln_g_ref, ln_b_ref,
                        o_ref, hid_ref, vpad_ref, *, eps):
    # x_ref     : (B, L, D)        token embeddings (read once, layer 0)
    # in_w_ref  : (1, D, 3D) bf16  ; in_b_ref  : (1, 1, 3D) f32
    # sfw_ref   : (1, 3, 3, D)     short-filter taps (k=0,1,2 -> taps at l-2, l-1, l)
    # sfb_ref   : (1, 3, 1, D)     short-filter bias
    # h_ref     : (1, L, D)        causal long filter ; hb_ref : (1, 1, D) skip bias
    # out_w_ref : (1, D, D) bf16   ; out_b_ref : (1, 1, D) f32
    # ln_g_ref/ln_b_ref : (1, D)   final LayerNorm affine
    # o_ref     : (B, L, D)        final output (written only at the last layer step)
    # hid_ref   : (B, L, D) f32    VMEM-resident hidden state across layer steps
    # vpad_ref  : (B, 2L, D) f32   zero-padded conv scratch, rows [:, 0:L] kept at zero
    li = pl.program_id(0)
    n_layer = pl.num_programs(0)
    B, L, D = hid_ref.shape

    # ---- one-time init (grid axis is "arbitrary"/sequential, scratch persists) ----
    @pl.when(li == 0)
    def _():
        hid_ref[...] = x_ref[...]
        vpad_ref[:, 0:L, :] = jnp.zeros((B, L, D), jnp.float32)

    x = hid_ref[...]                                        # (B, L, D) f32
    xm = x.reshape(B * L, D).astype(jnp.bfloat16)           # flatten B*L into MXU M dim

    # ---- in_proj: (B*L, D) @ (D, 3D) + bias  (bf16 MXU operands, f32 accumulate) ----
    z = (jnp.dot(xm, in_w_ref[0], preferred_element_type=jnp.float32)
         + in_b_ref[0])                                     # (B*L, 3D)
    z = z.reshape(B, L, 3 * D)

    # ---- 3x causal depthwise short conv: Conv1d(C,C,3,padding=2,groups=C)[..., :L] ----
    sfw = sfw_ref[0]                                        # (3, 3, D)
    sfb = sfb_ref[0]                                        # (3, 1, D)

    def short_conv(g):
        zg = z[:, :, g * D:(g + 1) * D]                     # (B, L, D) lane-aligned slice
        vpad_ref[:, L:2 * L, :] = zg                        # rows [0:L] stay zero (causal pad)
        w = sfw[g]                                          # (3, D)
        return (vpad_ref[:, L - 2:2 * L - 2, :] * w[0:1]    # z[l-2]
                + vpad_ref[:, L - 1:2 * L - 1, :] * w[1:2]  # z[l-1]
                + zg * w[2:3] + sfb[g])                     # z[l]   (f32 VPU math)

    x0 = short_conv(0)
    x1 = short_conv(1)
    v = short_conv(2) * x1                                  # first gate (dropout = eval identity)

    # ---- causal long conv: y[b,l,d] = sum_{s<=l} h[s,d]*v[b,l-s,d] + hb[d]*v[b,l,d] ----
    vpad_ref[:, L:2 * L, :] = v
    acc0 = v * hb_ref[0]

    def lconv_body(s, acc):
        h_row = h_ref[:, pl.ds(s, 1), :]                    # (1, 1, D)
        v_shift = vpad_ref[:, pl.ds(L - s, L), :]           # (B, L, D); zeros where l < s
        return acc + h_row * v_shift

    # TODO(synk): O(L^2 D) direct form on the VPU; switch to chunked-Toeplitz/FFT with
    # pltpu.roll + stride-0 filter-row loads for production seq_len.
    acc = jax.lax.fori_loop(0, L, lconv_body, acc0, unroll=True)

    y = acc * x0                                            # second gate

    # ---- out_proj: (B*L, D) @ (D, D) + bias ----
    ym = y.reshape(B * L, D).astype(jnp.bfloat16)
    out = (jnp.dot(ym, out_w_ref[0], preferred_element_type=jnp.float32)
           + out_b_ref[0])                                  # (B*L, D) f32
    hid_ref[...] = out.reshape(B, L, D)

    # ---- drop_f (resid_dropout=0.0 -> identity) + ln_f, fused at the last layer step ----
    @pl.when(li == n_layer - 1)
    def _():
        mean = jnp.mean(out, axis=-1, keepdims=True)
        xc = out - mean
        var = jnp.mean(xc * xc, axis=-1, keepdims=True)
        inv = jax.lax.rsqrt(var + eps)
        o_ref[...] = ((xc * inv * ln_g_ref[...] + ln_b_ref[...])
                      .reshape(B, L, D).astype(o_ref.dtype))


def orchid_backbone(hidden, params, eps=1e-5):
    B, L, D = hidden.shape
    n_layer = params["in_w"].shape[0]

    flops_layer = (2 * B * L * D * 3 * D      # in_proj
                   + 2 * B * L * D * D        # out_proj
                   + 2 * B * L * L * D        # long conv
                   + 30 * B * L * D)          # short convs + gates
    flops = n_layer * flops_layer + 10 * B * L * D
    bytes_accessed = (2 * B * L * D * 4
                      + params["in_w"].size * 2 + params["out_w"].size * 2
                      + 4 * (params["in_b"].size + params["sfw"].size + params["sfb"].size
                             + params["h"].size + params["hb"].size + params["out_b"].size
                             + 2 * D))

    return pl.pallas_call(
        partial(orchid_stack_kernel, eps=eps),
        out_shape=jax.ShapeDtypeStruct((B, L, D), hidden.dtype),
        grid=(n_layer,),
        in_specs=[
            pl.BlockSpec((B, L, D), lambda li: (0, 0, 0)),          # embeddings (read once)
            pl.BlockSpec((1, D, 3 * D), lambda li: (li, 0, 0)),     # in_w (bf16)
            pl.BlockSpec((1, 1, 3 * D), lambda li: (li, 0, 0)),     # in_b
            pl.BlockSpec((1, 3, 3, D), lambda li: (li, 0, 0, 0)),   # sfw
            pl.BlockSpec((1, 3, 1, D), lambda li: (li, 0, 0, 0)),   # sfb
            pl.BlockSpec((1, L, D), lambda li: (li, 0, 0)),         # h (long filter)
            pl.BlockSpec((1, 1, D), lambda li: (li, 0, 0)),         # hb
            pl.BlockSpec((1, D, D), lambda li: (li, 0, 0)),         # out_w (bf16)
            pl.BlockSpec((1, 1, D), lambda li: (li, 0, 0)),         # out_b
            pl.BlockSpec((1, D), lambda li: (0, 0)),                # ln_g
            pl.BlockSpec((1, D), lambda li: (0, 0)),                # ln_b
        ],
        out_specs=pl.BlockSpec((B, L, D), lambda li: (0, 0, 0)),    # resident across layers
        scratch_shapes=[
            pltpu.VMEM((B, L, D), jnp.float32),                     # hidden state
            pltpu.VMEM((B, 2 * L, D), jnp.float32),                 # zero-padded conv scratch
        ],
        compiler_params=pltpu.CompilerParams(dimension_semantics=("arbitrary",)),
        cost_estimate=pl.CostEstimate(flops=int(flops), transcendentals=0,
                                      bytes_accessed=int(bytes_accessed)),
    )(hidden,
      params["in_w"], params["in_b"], params["sfw"], params["sfb"],
      params["h"], params["hb"], params["out_w"], params["out_b"],
      params["ln_g"], params["ln_b"])


# ------------------------------------ params & forward --------------------------------------

def init_params(key, *, d_model, n_layer, vocab_size, seq_len, initializer_range=0.02):
    D = d_model
    keys = jax.random.split(key, 1 + n_layer)
    # GPT2Embeddings (max_position_embeddings=0 -> word embeddings only); _init_weights: N(0, 0.02)
    emb = initializer_range * jax.random.normal(keys[0], (vocab_size, D), jnp.float32)

    out_std = initializer_range / math.sqrt(2 * n_layer)   # rescale_prenorm_residual (out_proj)
    decay = jnp.exp(-0.3 * jnp.arange(seq_len, dtype=jnp.float32))[:, None]
    in_w, in_b, out_w, out_b, sfw, sfb, h, hb = ([] for _ in range(8))
    for li in range(n_layer):
        k = jax.random.split(keys[1 + li], 6)
        in_w.append(initializer_range * jax.random.normal(k[0], (D, 3 * D), jnp.float32))
        in_b.append(jnp.zeros((1, 3 * D), jnp.float32))
        out_w.append(out_std * jax.random.normal(k[1], (D, D), jnp.float32))
        out_b.append(jnp.zeros((1, D), jnp.float32))
        sfw.append(jax.random.uniform(k[2], (3, 3, D), jnp.float32, -0.5, 0.5))
        sfb.append(jax.random.uniform(k[3], (3, 1, D), jnp.float32, -0.5, 0.5))
        # TODO(synk): Orchid's data-dependent filter-generation network source was not provided;
        # approximated with a static learned causal long filter (decaying init).
        h.append(0.1 * jax.random.normal(k[4], (seq_len, D), jnp.float32) * decay)
        hb.append(0.1 * jax.random.normal(k[5], (1, D), jnp.float32))

    return {
        "emb": emb,
        # MXU weights pre-cast to bf16 once here (no per-forward cast HLOs).
        "in_w": jnp.stack(in_w).astype(jnp.bfloat16),       # (n_layer, D, 3D)
        "in_b": jnp.stack(in_b),                            # (n_layer, 1, 3D)
        "out_w": jnp.stack(out_w).astype(jnp.bfloat16),     # (n_layer, D, D)
        "out_b": jnp.stack(out_b),                          # (n_layer, 1, D)
        "sfw": jnp.stack(sfw),                              # (n_layer, 3, 3, D)
        "sfb": jnp.stack(sfb),                              # (n_layer, 3, 1, D)
        "h": jnp.stack(h),                                  # (n_layer, L, D)
        "hb": jnp.stack(hb),                                # (n_layer, 1, D)
        "ln_g": jnp.ones((1, D), jnp.float32),
        "ln_b": jnp.zeros((1, D), jnp.float32),
    }


@jax.jit
def lm_backbone_orchid_forward(params, input_ids):
    # embeddings: token lookup (gather) kept in plain JAX glue
    hidden = jnp.take(params["emb"], input_ids, axis=0)     # (B, L, D) f32
    # all OrchidOperator layers + drop_f(identity) + ln_f fused in one pallas_call
    return orchid_backbone(hidden, params, eps=1e-5)


if __name__ == "__main__":
    # d_model=128 keeps every last dim lane-dense (multiple of 128).
    d_model, n_layer, vocab_size = 128, 2, 128
    B, L = 2, 8

    key = jax.random.PRNGKey(0)
    pkey, dkey = jax.random.split(key)
    params = init_params(pkey, d_model=d_model, n_layer=n_layer,
                         vocab_size=vocab_size, seq_len=L)
    input_ids = jax.random.randint(dkey, (B, L), 0, vocab_size, dtype=jnp.int32)

    out = lm_backbone_orchid_forward(params, input_ids)
    jax.block_until_ready(out)
    assert out.shape == (B, L, d_model) and out.dtype == jnp.float32
    print("KERNEL_OK")
</pallas_src>

<mosaic_0001>
module attributes {stable_mosaic.version = 11 : i64} {
  func.func @orchid_stack_kernel(%arg0: i32, %arg1: memref<2x8x128xf32, #tpu.memory_space<vmem>>, %arg2: memref<1x128x384xbf16, #tpu.memory_space<vmem>>, %arg3: memref<1x1x384xf32, #tpu.memory_space<vmem>>, %arg4: memref<1x3x3x128xf32, #tpu.memory_space<vmem>>, %arg5: memref<1x3x1x128xf32, #tpu.memory_space<vmem>>, %arg6: memref<1x8x128xf32, #tpu.memory_space<vmem>>, %arg7: memref<1x1x128xf32, #tpu.memory_space<vmem>>, %arg8: memref<1x128x128xbf16, #tpu.memory_space<vmem>>, %arg9: memref<1x1x128xf32, #tpu.memory_space<vmem>>, %arg10: memref<1x128xf32, #tpu.memory_space<vmem>>, %arg11: memref<1x128xf32, #tpu.memory_space<vmem>>, %arg12: memref<2x8x128xf32, #tpu.memory_space<vmem>>, %arg13: memref<2x8x128xf32, #tpu.memory_space<vmem>>, %arg14: memref<2x16x128xf32, #tpu.memory_space<vmem>>) attributes {dimension_semantics = [#tpu.dimension_semantics<arbitrary>], iteration_bounds = array<i64: 2>, scalar_prefetch = 0 : i64, scratch_operands = 2 : i64, tpu.core_type = #tpu.core_type<tc>, window_params = [{pipeline_mode = #tpu.pipeline_mode<synchronous>, transform_indices = @transform_0, window_bounds = array<i64: 2, 8, 128>}, {transform_indices = @transform_1, window_bounds = array<i64: 1, 128, 384>}, {transform_indices = @transform_2, window_bounds = array<i64: 1, 1, 384>}, {transform_indices = @transform_3, window_bounds = array<i64: 1, 3, 3, 128>}, {transform_indices = @transform_4, window_bounds = array<i64: 1, 3, 1, 128>}, {transform_indices = @transform_5, window_bounds = array<i64: 1, 8, 128>}, {transform_indices = @transform_6, window_bounds = array<i64: 1, 1, 128>}, {transform_indices = @transform_7, window_bounds = array<i64: 1, 128, 128>}, {transform_indices = @transform_8, window_bounds = array<i64: 1, 1, 128>}, {pipeline_mode = #tpu.pipeline_mode<synchronous>, transform_indices = @transform_9, window_bounds = array<i64: 1, 128>}, {pipeline_mode = #tpu.pipeline_mode<synchronous>, transform_indices = @transform_10, window_bounds = array<i64: 1, 128>}, {pipeline_mode = #tpu.pipeline_mode<synchronous>, transform_indices = @transform_11, window_bounds = array<i64: 2, 8, 128>}]} {
    %c0_i32 = arith.constant 0 : i32
    %0 = arith.cmpi eq, %arg0, %c0_i32 : i32
    %1 = arith.extui %0 : i1 to i32
    %c0_i32_0 = arith.constant 0 : i32
    %2 = arith.cmpi ne, %1, %c0_i32_0 : i32
    scf.if %2 {
      %c0_100 = arith.constant 0 : index
      %c0_101 = arith.constant 0 : index
      %c0_102 = arith.constant 0 : index
      %179 = vector.load %arg1[%c0_100, %c0_101, %c0_102] : memref<2x8x128xf32, #tpu.memory_space<vmem>>, vector<2x8x128xf32>
      %c0_103 = arith.constant 0 : index
      %c0_104 = arith.constant 0 : index
      %c0_105 = arith.constant 0 : index
      %180 = vector.load %arg13[%c0_103, %c0_104, %c0_105] : memref<2x8x128xf32, #tpu.memory_space<vmem>>, vector<2x8x128xf32>
      tpu.vector_store %arg13[%c0_103, %c0_104, %c0_105], %179 {strides = array<i32>} : memref<2x8x128xf32, #tpu.memory_space<vmem>>, vector<2x8x128xf32>,
      %cst_106 = arith.constant 0.000000e+00 : f32
      %181 = vector.broadcast %cst_106 : f32 to vector<2x8x128xf32>
      %c0_107 = arith.constant 0 : index
      %c0_108 = arith.constant 0 : index
      %c0_109 = arith.constant 0 : index
      %182 = vector.load %arg14[%c0_107, %c0_108, %c0_109] : memref<2x16x128xf32, #tpu.memory_space<vmem>>, vector<2x8x128xf32>
      tpu.vector_store %arg14[%c0_107, %c0_108, %c0_109], %181 {strides = array<i32>} : memref<2x16x128xf32, #tpu.memory_space<vmem>>, vector<2x8x128xf32>,
    } else {
    }
    %c0 = arith.constant 0 : index
    %c0_1 = arith.constant 0 : index
    %c0_2 = arith.constant 0 : index
    %3 = vector.load %arg13[%c0, %c0_1, %c0_2] : memref<2x8x128xf32, #tpu.memory_space<vmem>>, vector<2x8x128xf32>
    %4 = vector.shape_cast %3 : vector<2x8x128xf32> to vector<16x128xf32>
    %5 = arith.truncf %4 : vector<16x128xf32> to vector<16x128xbf16>
    %c0_3 = arith.constant 0 : index
    %c0_4 = arith.constant 0 : index
    %c0_5 = arith.constant 0 : index
    %6 = vector.load %arg2[%c0_3, %c0_4, %c0_5] : memref<1x128x384xbf16, #tpu.memory_space<vmem>>, vector<1x128x384xbf16>
    %7 = vector.shape_cast %6 : vector<1x128x384xbf16> to vector<128x384xbf16>
    %cst = arith.constant dense<0.000000e+00> : vector<16x384xf32>
    %8 = tpu.matmul %5, %7, %cst {dimension_numbers = #tpu.dot_dimension_numbers<[1], [0], [0], [1], [0, 0, 1, 1], [], []>} : vector<16x128xbf16>, vector<128x384xbf16>, vector<16x384xf32> -> vector<16x384xf32>
    %c0_6 = arith.constant 0 : index
    %c0_7 = arith.constant 0 : index
    %c0_8 = arith.constant 0 : index
    %9 = vector.load %arg3[%c0_6, %c0_7, %c0_8] : memref<1x1x384xf32, #tpu.memory_space<vmem>>, vector<1x1x384xf32>
    %10 = vector.shape_cast %9 : vector<1x1x384xf32> to vector<1x384xf32>
    %11 = vector.broadcast %10 : vector<1x384xf32> to vector<16x384xf32>
    %12 = arith.addf %8, %11 : vector<16x384xf32>
    %13 = vector.shape_cast %12 : vector<16x384xf32> to vector<2x8x384xf32>
    %c0_9 = arith.constant 0 : index
    %c0_10 = arith.constant 0 : index
    %c0_11 = arith.constant 0 : index
    %c0_12 = arith.constant 0 : index
    %14 = vector.load %arg4[%c0_9, %c0_10, %c0_11, %c0_12] : memref<1x3x3x128xf32, #tpu.memory_space<vmem>>, vector<1x3x3x128xf32>
    %15 = vector.shape_cast %14 : vector<1x3x3x128xf32> to vector<3x3x128xf32>
    %c0_13 = arith.constant 0 : index
    %c0_14 = arith.constant 0 : index
    %c0_15 = arith.constant 0 : index
    %c0_16 = arith.constant 0 : index
    %16 = vector.load %arg5[%c0_13, %c0_14, %c0_15, %c0_16] : memref<1x3x1x128xf32, #tpu.memory_space<vmem>>, vector<1x3x1x128xf32>
    %17 = vector.shape_cast %16 : vector<1x3x1x128xf32> to vector<3x1x128xf32>
    %18 = vector.extract_strided_slice %13 {offsets = [0, 0, 0], sizes = [2, 8, 128], strides = [1, 1, 1]} : vector<2x8x384xf32> to vector<2x8x128xf32>
    %c0_17 = arith.constant 0 : index
    %c8 = arith.constant 8 : index
    %c0_18 = arith.constant 0 : index
    %19 = vector.load %arg14[%c0_17, %c8, %c0_18] : memref<2x16x128xf32, #tpu.memory_space<vmem>>, vector<2x8x128xf32>
    tpu.vector_store %arg14[%c0_17, %c8, %c0_18], %18 {strides = array<i32>} : memref<2x16x128xf32, #tpu.memory_space<vmem>>, vector<2x8x128xf32>,
    %20 = vector.extract_strided_slice %15 {offsets = [0, 0, 0], sizes = [1, 3, 128], strides = [1, 1, 1]} : vector<3x3x128xf32> to vector<1x3x128xf32>
    %21 = vector.shape_cast %20 : vector<1x3x128xf32> to vector<3x128xf32>
    %c0_19 = arith.constant 0 : index
    %c6 = arith.constant 6 : index
    %c0_20 = arith.constant 0 : index
    %22 = vector.load %arg14[%c0_19, %c6, %c0_20] : memref<2x16x128xf32, #tpu.memory_space<vmem>>, vector<2x8x128xf32>
    %23 = vector.extract_strided_slice %21 {offsets = [0, 0], sizes = [1, 128], strides = [1, 1]} : vector<3x128xf32> to vector<1x128xf32>
    %24 = vector.shape_cast %23 : vector<1x128xf32> to vector<1x1x128xf32>
    %25 = vector.broadcast %24 : vector<1x1x128xf32> to vector<2x8x128xf32>
    %26 = arith.mulf %22, %25 : vector<2x8x128xf32>
    %c0_21 = arith.constant 0 : index
    %c7 = arith.constant 7 : index
    %c0_22 = arith.constant 0 : index
    %27 = vector.load %arg14[%c0_21, %c7, %c0_22] : memref<2x16x128xf32, #tpu.memory_space<vmem>>, vector<2x8x128xf32>
    %28 = vector.extract_strided_slice %21 {offsets = [1, 0], sizes = [1, 128], strides = [1, 1]} : vector<3x128xf32> to vector<1x128xf32>
    %29 = vector.shape_cast %28 : vector<1x128xf32> to vector<1x1x128xf32>
    %30 = vector.broadcast %29 : vector<1x1x128xf32> to vector<2x8x128xf32>
    %31 = arith.mulf %27, %30 : vector<2x8x128xf32>
    %32 = arith.addf %26, %31 : vector<2x8x128xf32>
    %33 = vector.extract_strided_slice %21 {offsets = [2, 0], sizes = [1, 128], strides = [1, 1]} : vector<3x128xf32> to vector<1x128xf32>
    %34 = vector.shape_cast %33 : vector<1x128xf32> to vector<1x1x128xf32>
    %35 = vector.broadcast %34 : vector<1x1x128xf32> to vector<2x8x128xf32>
    %36 = arith.mulf %18, %35 : vector<2x8x128xf32>
    %37 = arith.addf %32, %36 : vector<2x8x128xf32>
    %38 = vector.extract_strided_slice %17 {offsets = [0, 0, 0], sizes = [1, 1, 128], strides = [1, 1, 1]} : vector<3x1x128xf32> to vector<1x1x128xf32>
    %39 = vector.shape_cast %38 : vector<1x1x128xf32> to vector<1x128xf32>
    %40 = vector.shape_cast %39 : vector<1x128xf32> to vector<1x1x128xf32>
    %41 = vector.broadcast %40 : vector<1x1x128xf32> to vector<2x8x128xf32>
    %42 = arith.addf %37, %41 : vector<2x8x128xf32>
    %43 = vector.extract_strided_slice %13 {offsets = [0, 0, 128], sizes = [2, 8, 128], strides = [1, 1, 1]} : vector<2x8x384xf32> to vector<2x8x128xf32>
    %c0_23 = arith.constant 0 : index
    %c8_24 = arith.constant 8 : index
    %c0_25 = arith.constant 0 : index
    %44 = vector.load %arg14[%c0_23, %c8_24, %c0_25] : memref<2x16x128xf32, #tpu.memory_space<vmem>>, vector<2x8x128xf32>
    tpu.vector_store %arg14[%c0_23, %c8_24, %c0_25], %43 {strides = array<i32>} : memref<2x16x128xf32, #tpu.memory_space<vmem>>, vector<2x8x128xf32>,
    %45 = vector.extract_strided_slice %15 {offsets = [1, 0, 0], sizes = [1, 3, 128], strides = [1, 1, 1]} : vector<3x3x128xf32> to vector<1x3x128xf32>
    %46 = vector.shape_cast %45 : vector<1x3x128xf32> to vector<3x128xf32>
    %c0_26 = arith.constant 0 : index
    %c6_27 = arith.constant 6 : index
    %c0_28 = arith.constant 0 : index
    %47 = vector.load %arg14[%c0_26, %c6_27, %c0_28] : memref<2x16x128xf32, #tpu.memory_space<vmem>>, vector<2x8x128xf32>
    %48 = vector.extract_strided_slice %46 {offsets = [0, 0], sizes = [1, 128], strides = [1, 1]} : vector<3x128xf32> to vector<1x128xf32>
    %49 = vector.shape_cast %48 : vector<1x128xf32> to vector<1x1x128xf32>
    %50 = vector.broadcast %49 : vector<1x1x128xf32> to vector<2x8x128xf32>
    %51 = arith.mulf %47, %50 : vector<2x8x128xf32>
    %c0_29 = arith.constant 0 : index
    %c7_30 = arith.constant 7 : index
    %c0_31 = arith.constant 0 : index
    %52 = vector.load %arg14[%c0_29, %c7_30, %c0_31] : memref<2x16x128xf32, #tpu.memory_space<vmem>>, vector<2x8x128xf32>
    %53 = vector.extract_strided_slice %46 {offsets = [1, 0], sizes = [1, 128], strides = [1, 1]} : vector<3x128xf32> to vector<1x128xf32>
    %54 = vector.shape_cast %53 : vector<1x128xf32> to vector<1x1x128xf32>
    %55 = vector.broadcast %54 : vector<1x1x128xf32> to vector<2x8x128xf32>
    %56 = arith.mulf %52, %55 : vector<2x8x128xf32>
    %57 = arith.addf %51, %56 : vector<2x8x128xf32>
    %58 = vector.extract_strided_slice %46 {offsets = [2, 0], sizes = [1, 128], strides = [1, 1]} : vector<3x128xf32> to vector<1x128xf32>
    %59 = vector.shape_cast %58 : vector<1x128xf32> to vector<1x1x128xf32>
    %60 = vector.broadcast %59 : vector<1x1x128xf32> to vector<2x8x128xf32>
    %61 = arith.mulf %43, %60 : vector<2x8x128xf32>
    %62 = arith.addf %57, %61 : vector<2x8x128xf32>
    %63 = vector.extract_strided_slice %17 {offsets = [1, 0, 0], sizes = [1, 1, 128], strides = [1, 1, 1]} : vector<3x1x128xf32> to vector<1x1x128xf32>
    %64 = vector.shape_cast %63 : vector<1x1x128xf32> to vector<1x128xf32>
    %65 = vector.shape_cast %64 : vector<1x128xf32> to vector<1x1x128xf32>
    %66 = vector.broadcast %65 : vector<1x1x128xf32> to vector<2x8x128xf32>
    %67 = arith.addf %62, %66 : vector<2x8x128xf32>
    %68 = vector.extract_strided_slice %13 {offsets = [0, 0, 256], sizes = [2, 8, 128], strides = [1, 1, 1]} : vector<2x8x384xf32> to vector<2x8x128xf32>
    %c0_32 = arith.constant 0 : index
    %c8_33 = arith.constant 8 : index
    %c0_34 = arith.constant 0 : index
    %69 = vector.load %arg14[%c0_32, %c8_33, %c0_34] : memref<2x16x128xf32, #tpu.memory_space<vmem>>, vector<2x8x128xf32>
    tpu.vector_store %arg14[%c0_32, %c8_33, %c0_34], %68 {strides = array<i32>} : memref<2x16x128xf32, #tpu.memory_space<vmem>>, vector<2x8x128xf32>,
    %70 = vector.extract_strided_slice %15 {offsets = [2, 0, 0], sizes = [1, 3, 128], strides = [1, 1, 1]} : vector<3x3x128xf32> to vector<1x3x128xf32>
    %71 = vector.shape_cast %70 : vector<1x3x128xf32> to vector<3x128xf32>
    %c0_35 = arith.constant 0 : index
    %c6_36 = arith.constant 6 : index
    %c0_37 = arith.constant 0 : index
    %72 = vector.load %arg14[%c0_35, %c6_36, %c0_37] : memref<2x16x128xf32, #tpu.memory_space<vmem>>, vector<2x8x128xf32>
    %73 = vector.extract_strided_slice %71 {offsets = [0, 0], sizes = [1, 128], strides = [1, 1]} : vector<3x128xf32> to vector<1x128xf32>
    %74 = vector.shape_cast %73 : vector<1x128xf32> to vector<1x1x128xf32>
    %75 = vector.broadcast %74 : vector<1x1x128xf32> to vector<2x8x128xf32>
    %76 = arith.mulf %72, %75 : vector<2x8x128xf32>
    %c0_38 = arith.constant 0 : index
    %c7_39 = arith.constant 7 : index
    %c0_40 = arith.constant 0 : index
    %77 = vector.load %arg14[%c0_38, %c7_39, %c0_40] : memref<2x16x128xf32, #tpu.memory_space<vmem>>, vector<2x8x128xf32>
    %78 = vector.extract_strided_slice %71 {offsets = [1, 0], sizes = [1, 128], strides = [1, 1]} : vector<3x128xf32> to vector<1x128xf32>
    %79 = vector.shape_cast %78 : vector<1x128xf32> to vector<1x1x128xf32>
    %80 = vector.broadcast %79 : vector<1x1x128xf32> to vector<2x8x128xf32>
    %81 = arith.mulf %77, %80 : vector<2x8x128xf32>
    %82 = arith.addf %76, %81 : vector<2x8x128xf32>
    %83 = vector.extract_strided_slice %71 {offsets = [2, 0], sizes = [1, 128], strides = [1, 1]} : vector<3x128xf32> to vector<1x128xf32>
    %84 = vector.shape_cast %83 : vector<1x128xf32> to vector<1x1x128xf32>
    %85 = vector.broadcast %84 : vector<1x1x128xf32> to vector<2x8x128xf32>
    %86 = arith.mulf %68, %85 : vector<2x8x128xf32>
    %87 = arith.addf %82, %86 : vector<2x8x128xf32>
    %88 = vector.extract_strided_slice %17 {offsets = [2, 0, 0], sizes = [1, 1, 128], strides = [1, 1, 1]} : vector<3x1x128xf32> to vector<1x1x128xf32>
    %89 = vector.shape_cast %88 : vector<1x1x128xf32> to vector<1x128xf32>
    %90 = vector.shape_cast %89 : vector<1x128xf32> to vector<1x1x128xf32>
    %91 = vector.broadcast %90 : vector<1x1x128xf32> to vector<2x8x128xf32>
    %92 = arith.addf %87, %91 : vector<2x8x128xf32>
    %93 = arith.mulf %92, %67 : vector<2x8x128xf32>
    %c0_41 = arith.constant 0 : index
    %c8_42 = arith.constant 8 : index
    %c0_43 = arith.constant 0 : index
    %94 = vector.load %arg14[%c0_41, %c8_42, %c0_43] : memref<2x16x128xf32, #tpu.memory_space<vmem>>, vector<2x8x128xf32>
    tpu.vector_store %arg14[%c0_41, %c8_42, %c0_43], %93 {strides = array<i32>} : memref<2x16x128xf32, #tpu.memory_space<vmem>>, vector<2x8x128xf32>,
    %c0_44 = arith.constant 0 : index
    %c0_45 = arith.constant 0 : index
    %c0_46 = arith.constant 0 : index
    %95 = vector.load %arg7[%c0_44, %c0_45, %c0_46] : memref<1x1x128xf32, #tpu.memory_space<vmem>>, vector<1x1x128xf32>
    %96 = vector.shape_cast %95 : vector<1x1x128xf32> to vector<1x128xf32>
    %97 = vector.shape_cast %96 : vector<1x128xf32> to vector<1x1x128xf32>
    %98 = vector.broadcast %97 : vector<1x1x128xf32> to vector<2x8x128xf32>
    %99 = arith.mulf %93, %98 : vector<2x8x128xf32>
    %c0_i32_47 = arith.constant 0 : i32
    %c0_48 = arith.constant 0 : index
    %100 = arith.index_cast %c0_i32_47 : i32 to index
    %c0_49 = arith.constant 0 : index
    %101 = vector.load %arg6[%c0_48, %100, %c0_49] : memref<1x8x128xf32, #tpu.memory_space<vmem>>, vector<1x1x128xf32>
    %c8_i32 = arith.constant 8 : i32
    %102 = arith.subi %c8_i32, %c0_i32_47 : i32
    %c0_50 = arith.constant 0 : index
    %103 = arith.index_cast %102 : i32 to index
    %c0_51 = arith.constant 0 : index
    %104 = vector.load %arg14[%c0_50, %103, %c0_51] : memref<2x16x128xf32, #tpu.memory_space<vmem>>, vector<2x8x128xf32>
    %105 = vector.broadcast %101 : vector<1x1x128xf32> to vector<2x8x128xf32>
    %106 = arith.mulf %105, %104 : vector<2x8x128xf32>
    %107 = arith.addf %99, %106 : vector<2x8x128xf32>
    %c1_i32 = arith.constant 1 : i32
    %c0_52 = arith.constant 0 : index
    %108 = arith.index_cast %c1_i32 : i32 to index
    %c0_53 = arith.constant 0 : index
    %109 = vector.load %arg6[%c0_52, %108, %c0_53] : memref<1x8x128xf32, #tpu.memory_space<vmem>>, vector<1x1x128xf32>
    %c8_i32_54 = arith.constant 8 : i32
    %110 = arith.subi %c8_i32_54, %c1_i32 : i32
    %c0_55 = arith.constant 0 : index
    %111 = arith.index_cast %110 : i32 to index
    %c0_56 = arith.constant 0 : index
    %112 = vector.load %arg14[%c0_55, %111, %c0_56] : memref<2x16x128xf32, #tpu.memory_space<vmem>>, vector<2x8x128xf32>
    %113 = vector.broadcast %109 : vector<1x1x128xf32> to vector<2x8x128xf32>
    %114 = arith.mulf %113, %112 : vector<2x8x128xf32>
    %115 = arith.addf %107, %114 : vector<2x8x128xf32>
    %c2_i32 = arith.constant 2 : i32
    %c0_57 = arith.constant 0 : index
    %116 = arith.index_cast %c2_i32 : i32 to index
    %c0_58 = arith.constant 0 : index
    %117 = vector.load %arg6[%c0_57, %116, %c0_58] : memref<1x8x128xf32, #tpu.memory_space<vmem>>, vector<1x1x128xf32>
    %c8_i32_59 = arith.constant 8 : i32
    %118 = arith.subi %c8_i32_59, %c2_i32 : i32
    %c0_60 = arith.constant 0 : index
    %119 = arith.index_cast %118 : i32 to index
    %c0_61 = arith.constant 0 : index
    %120 = vector.load %arg14[%c0_60, %119, %c0_61] : memref<2x16x128xf32, #tpu.memory_space<vmem>>, vector<2x8x128xf32>
    %121 = vector.broadcast %117 : vector<1x1x128xf32> to vector<2x8x128xf32>
    %122 = arith.mulf %121, %120 : vector<2x8x128xf32>
    %123 = arith.addf %115, %122 : vector<2x8x128xf32>
    %c3_i32 = arith.constant 3 : i32
    %c0_62 = arith.constant 0 : index
    %124 = arith.index_cast %c3_i32 : i32 to index
    %c0_63 = arith.constant 0 : index
    %125 = vector.load %arg6[%c0_62, %124, %c0_63] : memref<1x8x128xf32, #tpu.memory_space<vmem>>, vector<1x1x128xf32>
    %c8_i32_64 = arith.constant 8 : i32
    %126 = arith.subi %c8_i32_64, %c3_i32 : i32
    %c0_65 = arith.constant 0 : index
    %127 = arith.index_cast %126 : i32 to index
    %c0_66 = arith.constant 0 : index
    %128 = vector.load %arg14[%c0_65, %127, %c0_66] : memref<2x16x128xf32, #tpu.memory_space<vmem>>, vector<2x8x128xf32>
    %129 = vector.broadcast %125 : vector<1x1x128xf32> to vector<2x8x128xf32>
    %130 = arith.mulf %129, %128 : vector<2x8x128xf32>
    %131 = arith.addf %123, %130 : vector<2x8x128xf32>
    %c4_i32 = arith.constant 4 : i32
    %c0_67 = arith.constant 0 : index
    %132 = arith.index_cast %c4_i32 : i32 to index
    %c0_68 = arith.constant 0 : index
    %133 = vector.load %arg6[%c0_67, %132, %c0_68] : memref<1x8x128xf32, #tpu.memory_space<vmem>>, vector<1x1x128xf32>
    %c8_i32_69 = arith.constant 8 : i32
    %134 = arith.subi %c8_i32_69, %c4_i32 : i32
    %c0_70 = arith.constant 0 : index
    %135 = arith.index_cast %134 : i32 to index
    %c0_71 = arith.constant 0 : index
    %136 = vector.load %arg14[%c0_70, %135, %c0_71] : memref<2x16x128xf32, #tpu.memory_space<vmem>>, vector<2x8x128xf32>
    %137 = vector.broadcast %133 : vector<1x1x128xf32> to vector<2x8x128xf32>
    %138 = arith.mulf %137, %136 : vector<2x8x128xf32>
    %139 = arith.addf %131, %138 : vector<2x8x128xf32>
    %c5_i32 = arith.constant 5 : i32
    %c0_72 = arith.constant 0 : index
    %140 = arith.index_cast %c5_i32 : i32 to index
    %c0_73 = arith.constant 0 : index
    %141 = vector.load %arg6[%c0_72, %140, %c0_73] : memref<1x8x128xf32, #tpu.memory_space<vmem>>, vector<1x1x128xf32>
    %c8_i32_74 = arith.constant 8 : i32
    %142 = arith.subi %c8_i32_74, %c5_i32 : i32
    %c0_75 = arith.constant 0 : index
    %143 = arith.index_cast %142 : i32 to index
    %c0_76 = arith.constant 0 : index
    %144 = vector.load %arg14[%c0_75, %143, %c0_76] : memref<2x16x128xf32, #tpu.memory_space<vmem>>, vector<2x8x128xf32>
    %145 = vector.broadcast %141 : vector<1x1x128xf32> to vector<2x8x128xf32>
    %146 = arith.mulf %145, %144 : vector<2x8x128xf32>
    %147 = arith.addf %139, %146 : vector<2x8x128xf32>
    %c6_i32 = arith.constant 6 : i32
    %c0_77 = arith.constant 0 : index
    %148 = arith.index_cast %c6_i32 : i32 to index
    %c0_78 = arith.constant 0 : index
    %149 = vector.load %arg6[%c0_77, %148, %c0_78] : memref<1x8x128xf32, #tpu.memory_space<vmem>>, vector<1x1x128xf32>
    %c8_i32_79 = arith.constant 8 : i32
    %150 = arith.subi %c8_i32_79, %c6_i32 : i32
    %c0_80 = arith.constant 0 : index
    %151 = arith.index_cast %150 : i32 to index
    %c0_81 = arith.constant 0 : index
    %152 = vector.load %arg14[%c0_80, %151, %c0_81] : memref<2x16x128xf32, #tpu.memory_space<vmem>>, vector<2x8x128xf32>
    %153 = vector.broadcast %149 : vector<1x1x128xf32> to vector<2x8x128xf32>
    %154 = arith.mulf %153, %152 : vector<2x8x128xf32>
    %155 = arith.addf %147, %154 : vector<2x8x128xf32>
    %c7_i32 = arith.constant 7 : i32
    %c0_82 = arith.constant 0 : index
    %156 = arith.index_cast %c7_i32 : i32 to index
    %c0_83 = arith.constant 0 : index
    %157 = vector.load %arg6[%c0_82, %156, %c0_83] : memref<1x8x128xf32, #tpu.memory_space<vmem>>, vector<1x1x128xf32>
    %c8_i32_84 = arith.constant 8 : i32
    %158 = arith.subi %c8_i32_84, %c7_i32 : i32
    %c0_85 = arith.constant 0 : index
    %159 = arith.index_cast %158 : i32 to index
    %c0_86 = arith.constant 0 : index
    %160 = vector.load %arg14[%c0_85, %159, %c0_86] : memref<2x16x128xf32, #tpu.memory_space<vmem>>, vector<2x8x128xf32>
    %161 = vector.broadcast %157 : vector<1x1x128xf32> to vector<2x8x128xf32>
    %162 = arith.mulf %161, %160 : vector<2x8x128xf32>
    %163 = arith.addf %155, %162 : vector<2x8x128xf32>
    %c8_i32_87 = arith.constant 8 : i32
    %164 = arith.mulf %163, %42 : vector<2x8x128xf32>
    %165 = vector.shape_cast %164 : vector<2x8x128xf32> to vector<16x128xf32>
    %166 = arith.truncf %165 : vector<16x128xf32> to vector<16x128xbf16>
    %c0_88 = arith.constant 0 : index
    %c0_89 = arith.constant 0 : index
    %c0_90 = arith.constant 0 : index
    %167 = vector.load %arg8[%c0_88, %c0_89, %c0_90] : memref<1x128x128xbf16, #tpu.memory_space<vmem>>, vector<1x128x128xbf16>
    %168 = vector.shape_cast %167 : vector<1x128x128xbf16> to vector<128x128xbf16>
    %cst_91 = arith.constant dense<0.000000e+00> : vector<16x128xf32>
    %169 = tpu.matmul %166, %168, %cst_91 {dimension_numbers = #tpu.dot_dimension_numbers<[1], [0], [0], [1], [0, 0, 1, 1], [], []>} : vector<16x128xbf16>, vector<128x128xbf16>, vector<16x128xf32> -> vector<16x128xf32>
    %c0_92 = arith.constant 0 : index
    %c0_93 = arith.constant 0 : index
    %c0_94 = arith.constant 0 : index
    %170 = vector.load %arg9[%c0_92, %c0_93, %c0_94] : memref<1x1x128xf32, #tpu.memory_space<vmem>>, vector<1x1x128xf32>
    %171 = vector.shape_cast %170 : vector<1x1x128xf32> to vector<1x128xf32>
    %172 = vector.broadcast %171 : vector<1x128xf32> to vector<16x128xf32>
    %173 = arith.addf %169, %172 : vector<16x128xf32>
    %174 = vector.shape_cast %173 : vector<16x128xf32> to vector<2x8x128xf32>
    %c0_95 = arith.constant 0 : index
    %c0_96 = arith.constant 0 : index
    %c0_97 = arith.constant 0 : index
    %175 = vector.load %arg13[%c0_95, %c0_96, %c0_97] : memref<2x8x128xf32, #tpu.memory_space<vmem>>, vector<2x8x128xf32>
    tpu.vector_store %arg13[%c0_95, %c0_96, %c0_97], %174 {strides = array<i32>} : memref<2x8x128xf32, #tpu.memory_space<vmem>>, vector<2x8x128xf32>,
    %c1_i32_98 = arith.constant 1 : i32
    %176 = arith.cmpi eq, %arg0, %c1_i32_98 : i32
    %177 = arith.extui %176 : i1 to i32
    %c0_i32_99 = arith.constant 0 : i32
    %178 = arith.cmpi ne, %177, %c0_i32_99 : i32
    scf.if %178 {
      %cst_100 = arith.constant dense<0.000000e+00> : vector<16xf32>
      %179 = vector.multi_reduction <add>, %173, %cst_100 [1] : vector<16x128xf32> to vector<16xf32>
      %180 = vector.shape_cast %179 : vector<16xf32> to vector<16x1xf32>
      %cst_101 = arith.constant 1.280000e+02 : f32
      %181 = vector.broadcast %cst_101 : f32 to vector<16x1xf32>
      %182 = arith.divf %180, %181 : vector<16x1xf32>
      %183 = vector.broadcast %182 : vector<16x1xf32> to vector<16x128xf32>
      %184 = arith.subf %173, %183 : vector<16x128xf32>
      %185 = arith.mulf %184, %184 : vector<16x128xf32>
      %cst_102 = arith.constant dense<0.000000e+00> : vector<16xf32>
      %186 = vector.multi_reduction <add>, %185, %cst_102 [1] : vector<16x128xf32> to vector<16xf32>
      %187 = vector.shape_cast %186 : vector<16xf32> to vector<16x1xf32>
      %cst_103 = arith.constant 1.280000e+02 : f32
      %188 = vector.broadcast %cst_103 : f32 to vector<16x1xf32>
      %189 = arith.divf %187, %188 : vector<16x1xf32>
      %cst_104 = arith.constant 9.99999974E-6 : f32
      %190 = vector.broadcast %cst_104 : f32 to vector<16x1xf32>
      %191 = arith.addf %189, %190 : vector<16x1xf32>
      %192 = math.rsqrt %191 : vector<16x1xf32>
      %193 = vector.broadcast %192 : vector<16x1xf32> to vector<16x128xf32>
      %194 = arith.mulf %184, %193 : vector<16x128xf32>
      %c0_105 = arith.constant 0 : index
      %c0_106 = arith.constant 0 : index
      %195 = vector.load %arg10[%c0_105, %c0_106] : memref<1x128xf32, #tpu.memory_space<vmem>>, vector<1x128xf32>
      %196 = vector.broadcast %195 : vector<1x128xf32> to vector<16x128xf32>
      %197 = arith.mulf %194, %196 : vector<16x128xf32>
      %c0_107 = arith.constant 0 : index
      %c0_108 = arith.constant 0 : index
      %198 = vector.load %arg11[%c0_107, %c0_108] : memref<1x128xf32, #tpu.memory_space<vmem>>, vector<1x128xf32>
      %199 = vector.broadcast %198 : vector<1x128xf32> to vector<16x128xf32>
      %200 = arith.addf %197, %199 : vector<16x128xf32>
      %201 = vector.shape_cast %200 : vector<16x128xf32> to vector<2x8x128xf32>
      %c0_109 = arith.constant 0 : index
      %c0_110 = arith.constant 0 : index
      %c0_111 = arith.constant 0 : index
      %202 = vector.load %arg12[%c0_109, %c0_110, %c0_111] : memref<2x8x128xf32, #tpu.memory_space<vmem>>, vector<2x8x128xf32>
      tpu.vector_store %arg12[%c0_109, %c0_110, %c0_111], %201 {strides = array<i32>} : memref<2x8x128xf32, #tpu.memory_space<vmem>>, vector<2x8x128xf32>,
    } else {
    }
    return
  }
  func.func @transform_0(%arg0: i32) -> (i32, i32, i32) {
    %c0_i32 = arith.constant 0 : i32
    %c0_i32_0 = arith.constant 0 : i32
    %c0_i32_1 = arith.constant 0 : i32
    %c0_i32_2 = arith.constant 0 : i32
    return %c0_i32, %c0_i32_0, %c0_i32_1 : i32, i32, i32
  }
  func.func @transform_1(%arg0: i32) -> (i32, i32, i32) {
    %c0_i32 = arith.constant 0 : i32
    %c0_i32_0 = arith.constant 0 : i32
    %c0_i32_1 = arith.constant 0 : i32
    return %arg0, %c0_i32, %c0_i32_0 : i32, i32, i32
  }
  func.func @transform_2(%arg0: i32) -> (i32, i32, i32) {
    %c0_i32 = arith.constant 0 : i32
    %c0_i32_0 = arith.constant 0 : i32
    %c0_i32_1 = arith.constant 0 : i32
    return %arg0, %c0_i32, %c0_i32_0 : i32, i32, i32
  }
  func.func @transform_3(%arg0: i32) -> (i32, i32, i32, i32) {
    %c0_i32 = arith.constant 0 : i32
    %c0_i32_0 = arith.constant 0 : i32
    %c0_i32_1 = arith.constant 0 : i32
    %c0_i32_2 = arith.constant 0 : i32
    return %arg0, %c0_i32, %c0_i32_0, %c0_i32_1 : i32, i32, i32, i32
  }
  func.func @transform_4(%arg0: i32) -> (i32, i32, i32, i32) {
    %c0_i32 = arith.constant 0 : i32
    %c0_i32_0 = arith.constant 0 : i32
    %c0_i32_1 = arith.constant 0 : i32
    %c0_i32_2 = arith.constant 0 : i32
    return %arg0, %c0_i32, %c0_i32_0, %c0_i32_1 : i32, i32, i32, i32
  }
  func.func @transform_5(%arg0: i32) -> (i32, i32, i32) {
    %c0_i32 = arith.constant 0 : i32
    %c0_i32_0 = arith.constant 0 : i32
    %c0_i32_1 = arith.constant 0 : i32
    return %arg0, %c0_i32, %c0_i32_0 : i32, i32, i32
  }
  func.func @transform_6(%arg0: i32) -> (i32, i32, i32) {
    %c0_i32 = arith.constant 0 : i32
    %c0_i32_0 = arith.constant 0 : i32
    %c0_i32_1 = arith.constant 0 : i32
    return %arg0, %c0_i32, %c0_i32_0 : i32, i32, i32
  }
  func.func @transform_7(%arg0: i32) -> (i32, i32, i32) {
    %c0_i32 = arith.constant 0 : i32
    %c0_i32_0 = arith.constant 0 : i32
    %c0_i32_1 = arith.constant 0 : i32
    return %arg0, %c0_i32, %c0_i32_0 : i32, i32, i32
  }
  func.func @transform_8(%arg0: i32) -> (i32, i32, i32) {
    %c0_i32 = arith.constant 0 : i32
    %c0_i32_0 = arith.constant 0 : i32
    %c0_i32_1 = arith.constant 0 : i32
    return %arg0, %c0_i32, %c0_i32_0 : i32, i32, i32
  }
  func.func @transform_9(%arg0: i32) -> (i32, i32) {
    %c0_i32 = arith.constant 0 : i32
    %c0_i32_0 = arith.constant 0 : i32
    %c0_i32_1 = arith.constant 0 : i32
    return %c0_i32, %c0_i32_0 : i32, i32
  }
  func.func @transform_10(%arg0: i32) -> (i32, i32) {
    %c0_i32 = arith.constant 0 : i32
    %c0_i32_0 = arith.constant 0 : i32
    %c0_i32_1 = arith.constant 0 : i32
    return %c0_i32, %c0_i32_0 : i32, i32
  }
  func.func @transform_11(%arg0: i32) -> (i32, i32, i32) {
    %c0_i32 = arith.constant 0 : i32
    %c0_i32_0 = arith.constant 0 : i32
    %c0_i32_1 = arith.constant 0 : i32
    %c0_i32_2 = arith.constant 0 : i32
    return %c0_i32, %c0_i32_0, %c0_i32_1 : i32, i32, i32
  }
}

</mosaic_0001>

<llo_original>
// kernel: lm_backbone_orchid_forward.1
$region0: #{lm_backbone_orchid_forward.1}
  #allocation0 [shape = 'u32[]', space=smem, size = 0x4, offset = 0x4, fixed_abs, tag = 'smem constant byte address 0x4 - core index']
  #allocation1 [shape = 'u32[144,128]{1,0:T(1,128)}', space=vmem, size = 0x12000, scoped, tag = 'internal scratch']
  #allocation2 [shape = 'f32[2,8,128]{2,1,0:T(8,128)}', space=vmem, size = 0x2000, scoped, tag = 'scratch operand']
  #allocation3 [shape = 'f32[2,16,128]{2,1,0:T(8,128)}', space=vmem, size = 0x4000, scoped, tag = 'scratch operand']
  %s0 = inlined_call_operand.vmem [shape: f32[2,8,128], index: 0, kind: input, shape index: {}]
  %s1 = inlined_call_operand.hbm [shape: bf16[2,128,384], index: 1, kind: input, shape index: {}]
  %s2 = inlined_call_operand.vmem [shape: f32[2,1,384], index: 2, kind: input, shape index: {}]
  %s3 = inlined_call_operand.vmem [shape: f32[2,3,3,128], index: 3, kind: input, shape index: {}]
  %s4 = inlined_call_operand.vmem [shape: f32[2,3,1,128], index: 4, kind: input, shape index: {}]
  %s5 = inlined_call_operand.vmem [shape: f32[2,8,128], index: 5, kind: input, shape index: {}]
  %s6 = inlined_call_operand.vmem [shape: f32[2,1,128], index: 6, kind: input, shape index: {}]
  %s7 = inlined_call_operand.vmem [shape: bf16[2,128,128], index: 7, kind: input, shape index: {}]
  %s8 = inlined_call_operand.vmem [shape: f32[2,1,128], index: 8, kind: input, shape index: {}]
  %s9 = inlined_call_operand.vmem [shape: f32[1,128], index: 9, kind: input, shape index: {}]
  %s10 = inlined_call_operand.vmem [shape: f32[1,128], index: 10, kind: input, shape index: {}]
  %s11 = inlined_call_operand.hbm [shape: f32[2,8,128], index: 11, kind: output, shape index: {}]
  %s12 = sld [smem:[#allocation0]]
  $region89: #{lm_backbone_orchid_forward.1} parent=0
    _
  %s14 = ssub.s32 1, %s12
  %s15 = scalar_select 0, %s14, %s12
  $region1: #{lm_backbone_orchid_forward.1} parent=0
    #allocation4 [shape = 'u8[196608]{0}', space=vmem, size = 0x30000, scoped, tag = 'input window, operand 1']
    #allocation5 [shape = 's32[2]{0}', space=sflag, size = 0x8, scoped, tag = 'scoped memory for lm_backbone_orchid_forward.1']
    #allocation6 [shape = 's32[2]{0}', space=sflag, size = 0x8, scoped, tag = 'scoped memory for lm_backbone_orchid_forward.1']
    #allocation7 [shape = 'u8[8192]{0}', space=vmem, size = 0x2000, scoped, tag = 'output window, operand 0, single buffered']
    %16 = vsyncpa [#allocation5], 0
    %s17 = scalar_lea.sflag [#allocation5], 1
    %18 = vsyncpa %s17, 0
    %19 = vsyncpa [#allocation6], 0
    loop: start=0, step=1, limit=4
    $region2: #{lm_backbone_orchid_forward.1} parent=1 // loop_pre_header
      _
    $region3: #{lm_backbone_orchid_forward.1} parent=1 // loop_header
      %s21 = sphi 0, %s25
      %p22 = scmp.ge.s32.totalorder %s21, 4
      %s29 = sphi 0, %s29
      %s31 = sphi 0, %s29
      %s32 = sphi 0, %s31
      %s46 = sphi 0, %s32
      %s52 = sphi 0, %s54
      %s55 = sphi 0, %s52
      %s56 = sphi 0, %s55
      %s72 = sphi 0, %s56
      %s78 = sphi 0, %s80
      %s81 = sphi 0, %s78
      %s82 = sphi 0, %s81
      %s98 = sphi 0, %s82
      %s104 = sphi 0, %s106
      %s107 = sphi 0, %s104
      %s108 = sphi 0, %s107
      %s124 = sphi 0, %s108
      %s130 = sphi 0, %s132
      %s133 = sphi 0, %s130
      %s134 = sphi 0, %s133
      %s150 = sphi 0, %s134
      %s156 = sphi 0, %s158
      %s159 = sphi 0, %s156
      %s160 = sphi 0, %s159
      %s176 = sphi 0, %s160
      %s182 = sphi 0, %s184
      %s185 = sphi 0, %s182
      %s186 = sphi 0, %s185
      %s202 = sphi 0, %s186
      %s208 = sphi 0, %s210
      %s211 = sphi 0, %s208
      %s212 = sphi 0, %s211
      %s228 = sphi 0, %s212
      %s234 = sphi 0, %s236
      %s237 = sphi 0, %s234
      %s238 = sphi 0, %s237
      %s254 = sphi 0, %s238
      %s258 = sphi 0, %s258
      %s260 = sphi 0, %s258
      %s261 = sphi 0, %s260
      %s275 = sphi 0, %s261
      %s279 = sphi 0, %s279
      %s281 = sphi 0, %s279
      %s282 = sphi 0, %s281
      %s296 = sphi 0, %s282
      %s300 = sphi 0, %s300
      %s302 = sphi 0, %s300
      %s303 = sphi 0, %s302
      %s317 = sphi 0, %s303
    $region4: #{lm_backbone_orchid_forward.1} parent=1 // loop_header_branch
      %24 = sbr.rel (%p22) target = $region8
    $region5: #{lm_backbone_orchid_forward.1} parent=1 // loop_body
      %s26 = ssub.s32 %s21, 1
      %s27 = ssub.s32 %s21, 2
      %s28 = sadd.s32 %s21, 1
      %s30 = sadd.s32 %s29, 1
      %p33 = scmp.eq.s32.totalorder %s21, 1
      %p34 = scmp.ne.s32.totalorder %s29, %s31
      %p35 = scmp.eq.s32.totalorder %s21, 0
      %p36 = por %p34, %p35
      %p37 = scmp.ne.s32.totalorder %s29, %s31
      %p38 = scmp.eq.s32.totalorder %s26, 1
      %p39 = por %p37, %p38
      %p40 = scmp.ne.s32.totalorder %s31, %s32
      %p41 = scmp.eq.s32.totalorder %s26, 0
      %p42 = por %p40, %p41
      %p43 = scmp.ne.s32.totalorder %s31, %s32
      %p44 = scmp.eq.s32.totalorder %s27, 1
      %p45 = por %p43, %p44
      %p47 = scmp.ne.s32.totalorder %s32, %s46
      %p48 = scmp.eq.s32.totalorder %s27, 0
      %p49 = por %p47, %p48
      %s50 = ssub.s32 %s21, %s28
      %p51 = scmp.eq.s32.totalorder %s50, 0
      %s53 = sadd.s32 %s52, 1
      %s54 = scalar_select %p51, %s52, %s53
      %p57 = pneg %p51
      %p58 = scmp.eq.s32.totalorder %s21, 1
      %p59 = por %p57, %p58
      %p60 = scmp.ne.s32.totalorder %s52, %s55
      %p61 = scmp.eq.s32.totalorder %s21, 0
      %p62 = por %p60, %p61
      %p63 = scmp.ne.s32.totalorder %s52, %s55
      %p64 = scmp.eq.s32.totalorder %s26, 1
      %p65 = por %p63, %p64
      %p66 = scmp.ne.s32.totalorder %s55, %s56
      %p67 = scmp.eq.s32.totalorder %s26, 0
      %p68 = por %p66, %p67
      %p69 = scmp.ne.s32.totalorder %s55, %s56
      %p70 = scmp.eq.s32.totalorder %s27, 1
      %p71 = por %p69, %p70
      %p73 = scmp.ne.s32.totalorder %s56, %s72
      %p74 = scmp.eq.s32.totalorder %s27, 0
      %p75 = por %p73, %p74
      %s76 = ssub.s32 %s21, %s28
      %p77 = scmp.eq.s32.totalorder %s76, 0
      %s79 = sadd.s32 %s78, 1
      %s80 = scalar_select %p77, %s78, %s79
      %p83 = pneg %p77
      %p84 = scmp.eq.s32.totalorder %s21, 1
      %p85 = por %p83, %p84
      %p86 = scmp.ne.s32.totalorder %s78, %s81
      %p87 = scmp.eq.s32.totalorder %s21, 0
      %p88 = por %p86, %p87
      %p89 = scmp.ne.s32.totalorder %s78, %s81
      %p90 = scmp.eq.s32.totalorder %s26, 1
      %p91 = por %p89, %p90
      %p92 = scmp.ne.s32.totalorder %s81, %s82
      %p93 = scmp.eq.s32.totalorder %s26, 0
      %p94 = por %p92, %p93
      %p95 = scmp.ne.s32.totalorder %s81, %s82
      %p96 = scmp.eq.s32.totalorder %s27, 1
      %p97 = por %p95, %p96
      %p99 = scmp.ne.s32.totalorder %s82, %s98
      %p100 = scmp.eq.s32.totalorder %s27, 0
      %p101 = por %p99, %p100
      %s102 = ssub.s32 %s21, %s28
      %p103 = scmp.eq.s32.totalorder %s102, 0
      %s105 = sadd.s32 %s104, 1
      %s106 = scalar_select %p103, %s104, %s105
      %p109 = pneg %p103
      %p110 = scmp.eq.s32.totalorder %s21, 1
      %p111 = por %p109, %p110
      %p112 = scmp.ne.s32.totalorder %s104, %s107
      %p113 = scmp.eq.s32.totalorder %s21, 0
      %p114 = por %p112, %p113
      %p115 = scmp.ne.s32.totalorder %s104, %s107
      %p116 = scmp.eq.s32.totalorder %s26, 1
      %p117 = por %p115, %p116
      %p118 = scmp.ne.s32.totalorder %s107, %s108
      %p119 = scmp.eq.s32.totalorder %s26, 0
      %p120 = por %p118, %p119
      %p121 = scmp.ne.s32.totalorder %s107, %s108
      %p122 = scmp.eq.s32.totalorder %s27, 1
      %p123 = por %p121, %p122
      %p125 = scmp.ne.s32.totalorder %s108, %s124
      %p126 = scmp.eq.s32.totalorder %s27, 0
      %p127 = por %p125, %p126
      %s128 = ssub.s32 %s21, %s28
      %p129 = scmp.eq.s32.totalorder %s128, 0
      %s131 = sadd.s32 %s130, 1
      %s132 = scalar_select %p129, %s130, %s131
      %p135 = pneg %p129
      %p136 = scmp.eq.s32.totalorder %s21, 1
      %p137 = por %p135, %p136
      %p138 = scmp.ne.s32.totalorder %s130, %s133
      %p139 = scmp.eq.s32.totalorder %s21, 0
      %p140 = por %p138, %p139
      %p141 = scmp.ne.s32.totalorder %s130, %s133
      %p142 = scmp.eq.s32.totalorder %s26, 1
      %p143 = por %p141, %p142
      %p144 = scmp.ne.s32.totalorder %s133, %s134
      %p145 = scmp.eq.s32.totalorder %s26, 0
      %p146 = por %p144, %p145
      %p147 = scmp.ne.s32.totalorder %s133, %s134
      %p148 = scmp.eq.s32.totalorder %s27, 1
      %p149 = por %p147, %p148
      %p151 = scmp.ne.s32.totalorder %s134, %s150
      %p152 = scmp.eq.s32.totalorder %s27, 0
      %p153 = por %p151, %p152
      %s154 = ssub.s32 %s21, %s28
      %p155 = scmp.eq.s32.totalorder %s154, 0
      %s157 = sadd.s32 %s156, 1
      %s158 = scalar_select %p155, %s156, %s157
      %p161 = pneg %p155
      %p162 = scmp.eq.s32.totalorder %s21, 1
      %p163 = por %p161, %p162
      %p164 = scmp.ne.s32.totalorder %s156, %s159
      %p165 = scmp.eq.s32.totalorder %s21, 0
      %p166 = por %p164, %p165
      %p167 = scmp.ne.s32.totalorder %s156, %s159
      %p168 = scmp.eq.s32.totalorder %s26, 1
      %p169 = por %p167, %p168
      %p170 = scmp.ne.s32.totalorder %s159, %s160
      %p171 = scmp.eq.s32.totalorder %s26, 0
      %p172 = por %p170, %p171
      %p173 = scmp.ne.s32.totalorder %s159, %s160
      %p174 = scmp.eq.s32.totalorder %s27, 1
      %p175 = por %p173, %p174
      %p177 = scmp.ne.s32.totalorder %s160, %s176
      %p178 = scmp.eq.s32.totalorder %s27, 0
      %p179 = por %p177, %p178
      %s180 = ssub.s32 %s21, %s28
      %p181 = scmp.eq.s32.totalorder %s180, 0
      %s183 = sadd.s32 %s182, 1
      %s184 = scalar_select %p181, %s182, %s183
      %p187 = pneg %p181
      %p188 = scmp.eq.s32.totalorder %s21, 1
      %p189 = por %p187, %p188
      %p190 = scmp.ne.s32.totalorder %s182, %s185
      %p191 = scmp.eq.s32.totalorder %s21, 0
      %p192 = por %p190, %p191
      %p193 = scmp.ne.s32.totalorder %s182, %s185
      %p194 = scmp.eq.s32.totalorder %s26, 1
      %p195 = por %p193, %p194
      %p196 = scmp.ne.s32.totalorder %s185, %s186
      %p197 = scmp.eq.s32.totalorder %s26, 0
      %p198 = por %p196, %p197
      %p199 = scmp.ne.s32.totalorder %s185, %s186
      %p200 = scmp.eq.s32.totalorder %s27, 1
      %p201 = por %p199, %p200
      %p203 = scmp.ne.s32.totalorder %s186, %s202
      %p204 = scmp.eq.s32.totalorder %s27, 0
      %p205 = por %p203, %p204
      %s206 = ssub.s32 %s21, %s28
      %p207 = scmp.eq.s32.totalorder %s206, 0
      %s209 = sadd.s32 %s208, 1
      %s210 = scalar_select %p207, %s208, %s209
      %p213 = pneg %p207
      %p214 = scmp.eq.s32.totalorder %s21, 1
      %p215 = por %p213, %p214
      %p216 = scmp.ne.s32.totalorder %s208, %s211
      %p217 = scmp.eq.s32.totalorder %s21, 0
      %p218 = por %p216, %p217
      %p219 = scmp.ne.s32.totalorder %s208, %s211
      %p220 = scmp.eq.s32.totalorder %s26, 1
      %p221 = por %p219, %p220
      %p222 = scmp.ne.s32.totalorder %s211, %s212
      %p223 = scmp.eq.s32.totalorder %s26, 0
      %p224 = por %p222, %p223
      %p225 = scmp.ne.s32.totalorder %s211, %s212
      %p226 = scmp.eq.s32.totalorder %s27, 1
      %p227 = por %p225, %p226
      %p229 = scmp.ne.s32.totalorder %s212, %s228
      %p230 = scmp.eq.s32.totalorder %s27, 0
      %p231 = por %p229, %p230
      %s232 = ssub.s32 %s21, %s28
      %p233 = scmp.eq.s32.totalorder %s232, 0
      %s235 = sadd.s32 %s234, 1
      %s236 = scalar_select %p233, %s234, %s235
      %p239 = pneg %p233
      %p240 = scmp.eq.s32.totalorder %s21, 1
      %p241 = por %p239, %p240
      %p242 = scmp.ne.s32.totalorder %s234, %s237
      %p243 = scmp.eq.s32.totalorder %s21, 0
      %p244 = por %p242, %p243
      %p245 = scmp.ne.s32.totalorder %s234, %s237
      %p246 = scmp.eq.s32.totalorder %s26, 1
      %p247 = por %p245, %p246
      %p248 = scmp.ne.s32.totalorder %s237, %s238
      %p249 = scmp.eq.s32.totalorder %s26, 0
      %p250 = por %p248, %p249
      %p251 = scmp.ne.s32.totalorder %s237, %s238
      %p252 = scmp.eq.s32.totalorder %s27, 1
      %p253 = por %p251, %p252
      %p255 = scmp.ne.s32.totalorder %s238, %s254
      %p256 = scmp.eq.s32.totalorder %s27, 0
      %p257 = por %p255, %p256
      %s259 = sadd.s32 %s258, 1
      %p262 = scmp.eq.s32.totalorder %s21, 1
      %p263 = scmp.ne.s32.totalorder %s258, %s260
      %p264 = scmp.eq.s32.totalorder %s21, 0
      %p265 = por %p263, %p264
      %p266 = scmp.ne.s32.totalorder %s258, %s260
      %p267 = scmp.eq.s32.totalorder %s26, 1
      %p268 = por %p266, %p267
      %p269 = scmp.ne.s32.totalorder %s260, %s261
      %p270 = scmp.eq.s32.totalorder %s26, 0
      %p271 = por %p269, %p270
      %p272 = scmp.ne.s32.totalorder %s260, %s261
      %p273 = scmp.eq.s32.totalorder %s27, 1
      %p274 = por %p272, %p273
      %p276 = scmp.ne.s32.totalorder %s261, %s275
      %p277 = scmp.eq.s32.totalorder %s27, 0
      %p278 = por %p276, %p277
      %s280 = sadd.s32 %s279, 1
      %p283 = scmp.eq.s32.totalorder %s21, 1
      %p284 = scmp.ne.s32.totalorder %s279, %s281
      %p285 = scmp.eq.s32.totalorder %s21, 0
      %p286 = por %p284, %p285
      %p287 = scmp.ne.s32.totalorder %s279, %s281
      %p288 = scmp.eq.s32.totalorder %s26, 1
      %p289 = por %p287, %p288
      %p290 = scmp.ne.s32.totalorder %s281, %s282
      %p291 = scmp.eq.s32.totalorder %s26, 0
      %p292 = por %p290, %p291
      %p293 = scmp.ne.s32.totalorder %s281, %s282
      %p294 = scmp.eq.s32.totalorder %s27, 1
      %p295 = por %p293, %p294
      %p297 = scmp.ne.s32.totalorder %s282, %s296
      %p298 = scmp.eq.s32.totalorder %s27, 0
      %p299 = por %p297, %p298
      %s301 = sadd.s32 %s300, 1
      %p304 = scmp.eq.s32.totalorder %s21, 1
      %p305 = scmp.ne.s32.totalorder %s300, %s302
      %p306 = scmp.eq.s32.totalorder %s21, 0
      %p307 = por %p305, %p306
      %p308 = scmp.ne.s32.totalorder %s300, %s302
      %p309 = scmp.eq.s32.totalorder %s26, 1
      %p310 = por %p308, %p309
      %p311 = scmp.ne.s32.totalorder %s302, %s303
      %p312 = scmp.eq.s32.totalorder %s26, 0
      %p313 = por %p311, %p312
      %p314 = scmp.ne.s32.totalorder %s302, %s303
      %p315 = scmp.eq.s32.totalorder %s27, 1
      %p316 = por %p314, %p315
      %p318 = scmp.ne.s32.totalorder %s303, %s317
      %p319 = scmp.eq.s32.totalorder %s27, 0
      %p320 = por %p318, %p319
      %p321 = scmp.le.s32.totalorder 1, %s21
      %p322 = scmp.lt.s32.totalorder %s21, 3
      %p323 = pnand %p321, %p322
      %p324 = pneg %p323
      // Predicated region
      $region9: #{lm_backbone_orchid_forward.1} parent=5 // pred_check
        _
      $region10: #{lm_backbone_orchid_forward.1} parent=5 // pred_check_branch
        %326 = sbr.rel (%p323) target = $region12
      $region11: #{lm_backbone_orchid_forward.1} parent=5 // pred_region
        %s327 = ssub.s32 %s21, 1
        // Predicated region
        $region13: #{lm_backbone_orchid_forward.1} parent=11 // pred_check
          %p328 = pneg %p42
        $region14: #{lm_backbone_orchid_forward.1} parent=11 // pred_check_branch
          %330 = sbr.rel (%p328) target = $region16
        $region15: #{lm_backbone_orchid_forward.1} parent=11 // pred_region
          _
        $region16: #{lm_backbone_orchid_forward.1} parent=11 // pred_fallthru
          _
        // Predicated region
        $region17: #{lm_backbone_orchid_forward.1} parent=11 // pred_check
          %p331 = pneg %p271
        $region18: #{lm_backbone_orchid_forward.1} parent=11 // pred_check_branch
          %333 = sbr.rel (%p331) target = $region20
        $region19: #{lm_backbone_orchid_forward.1} parent=11 // pred_region
          _
        $region20: #{lm_backbone_orchid_forward.1} parent=11 // pred_fallthru
          _
        // Predicated region
        $region21: #{lm_backbone_orchid_forward.1} parent=11 // pred_check
          %p334 = pneg %p292
        $region22: #{lm_backbone_orchid_forward.1} parent=11 // pred_check_branch
          %336 = sbr.rel (%p334) target = $region24
        $region23: #{lm_backbone_orchid_forward.1} parent=11 // pred_region
          _
        $region24: #{lm_backbone_orchid_forward.1} parent=11 // pred_fallthru
          _
      $region12: #{lm_backbone_orchid_forward.1} parent=5 // pred_fallthru
        _
      %p337 = scmp.lt.s32.totalorder %s21, 2
      // Predicated region
      $region25: #{lm_backbone_orchid_forward.1} parent=5 // pred_check
        %p338 = pneg %p337
      $region26: #{lm_backbone_orchid_forward.1} parent=5 // pred_check_branch
        %340 = sbr.rel (%p338) target = $region28
      $region27: #{lm_backbone_orchid_forward.1} parent=5 // pred_region
        // Predicated region
        $region29: #{lm_backbone_orchid_forward.1} parent=27 // pred_check
          %p341 = pneg %p62
        $region30: #{lm_backbone_orchid_forward.1} parent=27 // pred_check_branch
          %343 = sbr.rel (%p341) target = $region32
        $region31: #{lm_backbone_orchid_forward.1} parent=27 // pred_region
          %s344 = sand.u32 %s52, 1
          %s345 = scalar_lea.sflag [#allocation5], %s344
          %s346 = sand.u32 %s52, 1
          %s347 = smul.addr %s346, 192
          %s348 = scalar_lea.vmem [#allocation4], %s347
          %s350 = ssub.s32 3072, 3072
          %351 = vsyncadd %s345, %s350
          %s352 = smul.addr %s21, 48
          %s353 = smul.addr %s352, 64
          %s354 = scalar_lea.hbm %s1, %s353
          %s355 = sshll.u32 %s348, 4
          %s356 = int_to_ptr.vmem [resolvable:$true] %s355
          %361 = dma.hbm_to_vmem [thread:$0]  %s354, 3072, %s356, %s345, 192, 192, 12
        $region32: #{lm_backbone_orchid_forward.1} parent=27 // pred_fallthru
          _
        // Predicated region
        $region33: #{lm_backbone_orchid_forward.1} parent=27 // pred_check
          %p362 = pneg %p88
        $region34: #{lm_backbone_orchid_forward.1} parent=27 // pred_check_branch
          %364 = sbr.rel (%p362) target = $region36
        $region35: #{lm_backbone_orchid_forward.1} parent=27 // pred_region
          %p365 = scmp.lt.s32.totalorder %s21, 1
          %s366 = scalar_select %p365, %s21, 1
          %s367 = smul.addr %s366, 3
          %s368 = scalar_lea.vmem %s2, %s367
        $region36: #{lm_backbone_orchid_forward.1} parent=27 // pred_fallthru
          _
        // Predicated region
        $region37: #{lm_backbone_orchid_forward.1} parent=27 // pred_check
          %p369 = pneg %p114
        $region38: #{lm_backbone_orchid_forward.1} parent=27 // pred_check_branch
          %371 = sbr.rel (%p369) target = $region40
        $region39: #{lm_backbone_orchid_forward.1} parent=27 // pred_region
          %p372 = scmp.lt.s32.totalorder %s21, 1
          %s373 = scalar_select %p372, %s21, 1
          %s374 = smul.addr %s373, 3
          %s375 = smul.addr %s374, 4
          %s376 = scalar_lea.vmem %s3, %s375
        $region40: #{lm_backbone_orchid_forward.1} parent=27 // pred_fallthru
          _
        // Predicated region
        $region41: #{lm_backbone_orchid_forward.1} parent=27 // pred_check
          %p377 = pneg %p140
        $region42: #{lm_backbone_orchid_forward.1} parent=27 // pred_check_branch
          %379 = sbr.rel (%p377) target = $region44
        $region43: #{lm_backbone_orchid_forward.1} parent=27 // pred_region
          %p380 = scmp.lt.s32.totalorder %s21, 1
          %s381 = scalar_select %p380, %s21, 1
          %s382 = smul.addr %s381, 3
          %s383 = scalar_lea.vmem %s4, %s382
        $region44: #{lm_backbone_orchid_forward.1} parent=27 // pred_fallthru
          _
        // Predicated region
        $region45: #{lm_backbone_orchid_forward.1} parent=27 // pred_check
          %p384 = pneg %p166
        $region46: #{lm_backbone_orchid_forward.1} parent=27 // pred_check_branch
          %386 = sbr.rel (%p384) target = $region48
        $region47: #{lm_backbone_orchid_forward.1} parent=27 // pred_region
          %p387 = scmp.lt.s32.totalorder %s21, 1
          %s388 = scalar_select %p387, %s21, 1
          %s389 = smul.addr %s388, 8
          %s390 = scalar_lea.vmem %s5, %s389
        $region48: #{lm_backbone_orchid_forward.1} parent=27 // pred_fallthru
          _
        // Predicated region
        $region49: #{lm_backbone_orchid_forward.1} parent=27 // pred_check
          %p391 = pneg %p192
        $region50: #{lm_backbone_orchid_forward.1} parent=27 // pred_check_branch
          %393 = sbr.rel (%p391) target = $region52
        $region51: #{lm_backbone_orchid_forward.1} parent=27 // pred_region
          %p394 = scmp.lt.s32.totalorder %s21, 1
          %s395 = scalar_select %p394, %s21, 1
          %s396 = scalar_lea.vmem %s6, %s395
        $region52: #{lm_backbone_orchid_forward.1} parent=27 // pred_fallthru
          _
        // Predicated region
        $region53: #{lm_backbone_orchid_forward.1} parent=27 // pred_check
          %p397 = pneg %p218
        $region54: #{lm_backbone_orchid_forward.1} parent=27 // pred_check_branch
          %399 = sbr.rel (%p397) target = $region56
        $region55: #{lm_backbone_orchid_forward.1} parent=27 // pred_region
          %p400 = scmp.lt.s32.totalorder %s21, 1
          %s401 = scalar_select %p400, %s21, 1
          %s402 = smul.addr %s401, 16
          %s403 = smul.addr %s402, 4
          %s404 = scalar_lea.vmem %s7, %s403
        $region56: #{lm_backbone_orchid_forward.1} parent=27 // pred_fallthru
          _
        // Predicated region
        $region57: #{lm_backbone_orchid_forward.1} parent=27 // pred_check
          %p405 = pneg %p244
        $region58: #{lm_backbone_orchid_forward.1} parent=27 // pred_check_branch
          %407 = sbr.rel (%p405) target = $region60
        $region59: #{lm_backbone_orchid_forward.1} parent=27 // pred_region
          %p408 = scmp.lt.s32.totalorder %s21, 1
          %s409 = scalar_select %p408, %s21, 1
          %s410 = scalar_lea.vmem %s8, %s409
        $region60: #{lm_backbone_orchid_forward.1} parent=27 // pred_fallthru
          _
      $region28: #{lm_backbone_orchid_forward.1} parent=5 // pred_fallthru
        _
      %p411 = scmp.le.s32.totalorder 1, %s21
      %p412 = scmp.lt.s32.totalorder %s21, 3
      %p413 = pnand %p411, %p412
      %p414 = pneg %p413
      // Predicated region
      $region61: #{lm_backbone_orchid_forward.1} parent=5 // pred_check
        _
      $region62: #{lm_backbone_orchid_forward.1} parent=5 // pred_check_branch
        %416 = sbr.rel (%p413) target = $region64
      $region63: #{lm_backbone_orchid_forward.1} parent=5 // pred_region
        %s417 = ssub.s32 %s21, 1
        %s418 = sand.u32 %s55, 1
        %s419 = scalar_lea.sflag [#allocation5], %s418
        %s420 = sand.u32 %s55, 1
        %s421 = smul.addr %s420, 192
        %s422 = scalar_lea.vmem [#allocation4], %s421
        // Predicated region
        $region65: #{lm_backbone_orchid_forward.1} parent=63 // pred_check
          %p423 = pneg %p68
        $region66: #{lm_backbone_orchid_forward.1} parent=63 // pred_check_branch
          %425 = sbr.rel (%p423) target = $region68
        $region67: #{lm_backbone_orchid_forward.1} parent=63 // pred_region
          %426 = dma.done %s419, 3072
        $region68: #{lm_backbone_orchid_forward.1} parent=63 // pred_fallthru
          _
        %p427 = pneg %p42
        %p428 = pneg %p39
        %s429 = sand.u32 %s55, 1
        %s430 = scalar_lea.sflag [#allocation5], %s429
        %s431 = sand.u32 %s55, 1
        %s432 = smul.addr %s431, 192
        %s433 = scalar_lea.vmem [#allocation4], %s432
        %p434 = pneg %p68
        %p435 = pneg %p65
        %p436 = scmp.lt.s32.totalorder %s26, 1
        %s437 = scalar_select %p436, %s26, 1
        %s438 = smul.addr %s437, 3
        %s439 = scalar_lea.vmem %s2, %s438
        %p440 = pneg %p94
        %p441 = pneg %p91
        %p442 = scmp.lt.s32.totalorder %s26, 1
        %s443 = scalar_select %p442, %s26, 1
        %s444 = smul.addr %s443, 3
        %s445 = smul.addr %s444, 4
        %s446 = scalar_lea.vmem %s3, %s445
        %p447 = pneg %p120
        %p448 = pneg %p117
        %p449 = scmp.lt.s32.totalorder %s26, 1
        %s450 = scalar_select %p449, %s26, 1
        %s451 = smul.addr %s450, 3
        %s452 = scalar_lea.vmem %s4, %s451
        %p453 = pneg %p146
        %p454 = pneg %p143
        %p455 = scmp.lt.s32.totalorder %s26, 1
        %s456 = scalar_select %p455, %s26, 1
        %s457 = smul.addr %s456, 8
        %s458 = scalar_lea.vmem %s5, %s457
        %p459 = pneg %p172
        %p460 = pneg %p169
        %p461 = scmp.lt.s32.totalorder %s26, 1
        %s462 = scalar_select %p461, %s26, 1
        %s463 = scalar_lea.vmem %s6, %s462
        %p464 = pneg %p198
        %p465 = pneg %p195
        %p466 = scmp.lt.s32.totalorder %s26, 1
        %s467 = scalar_select %p466, %s26, 1
        %s468 = smul.addr %s467, 16
        %s469 = smul.addr %s468, 4
        %s470 = scalar_lea.vmem %s7, %s469
        %p471 = pneg %p224
        %p472 = pneg %p221
        %p473 = scmp.lt.s32.totalorder %s26, 1
        %s474 = scalar_select %p473, %s26, 1
        %s475 = scalar_lea.vmem %s8, %s474
        %p476 = pneg %p250
        %p477 = pneg %p247
        %p478 = pneg %p271
        %p479 = pneg %p268
        %p480 = pneg %p292
        %p481 = pneg %p289
        %p482 = pneg %p313
        %p483 = pneg %p310
        %p484 = scmp.lt.s32.totalorder %s26, 1
        %s485 = scalar_select %p484, %s26, 1
        %s486 = smul.addr %s485, 3
        %s487 = scalar_lea.vmem %s2, %s486
        %p488 = scmp.lt.s32.totalorder %s26, 1
        %s489 = scalar_select %p488, %s26, 1
        %s490 = smul.addr %s489, 3
        %s491 = smul.addr %s490, 4
        %s492 = scalar_lea.vmem %s3, %s491
        %p493 = scmp.lt.s32.totalorder %s26, 1
        %s494 = scalar_select %p493, %s26, 1
        %s495 = smul.addr %s494, 3
        %s496 = scalar_lea.vmem %s4, %s495
        %p497 = scmp.lt.s32.totalorder %s26, 1
        %s498 = scalar_select %p497, %s26, 1
        %s499 = smul.addr %s498, 8
        %s500 = scalar_lea.vmem %s5, %s499
        %p501 = scmp.lt.s32.totalorder %s26, 1
        %s502 = scalar_select %p501, %s26, 1
        %s503 = scalar_lea.vmem %s6, %s502
        %p504 = scmp.lt.s32.totalorder %s26, 1
        %s505 = scalar_select %p504, %s26, 1
        %s506 = smul.addr %s505, 16
        %s507 = smul.addr %s506, 4
        %s508 = scalar_lea.vmem %s7, %s507
        %p509 = scmp.lt.s32.totalorder %s26, 1
        %s510 = scalar_select %p509, %s26, 1
        %s511 = scalar_lea.vmem %s8, %s510
        %p513 = scmp.eq.s32.totalorder %s26, 0
        // Predicated region
        $region69: #{lm_backbone_orchid_forward.1} parent=63 // pred_check
          %p514 = pneg %p513
        $region70: #{lm_backbone_orchid_forward.1} parent=63 // pred_check_branch
          %516 = sbr.rel (%p514) target = $region72
        $region71: #{lm_backbone_orchid_forward.1} parent=63 // pred_region
          %v517 = vld [vmem:[%s0] sm:$0xff]
          %v518 = vld [vmem:[%s0 + $0x8] sm:$0xff]
          %519 = vst [vmem:[#allocation2] sm:$0xff] %v517
          %520 = vst [vmem:[#allocation2 + $0x8] sm:$0xff] %v518
          %521 = vst [vmem:[#allocation3] sm:$0xff] 0.0
          %522 = vst [vmem:[#allocation3 + $0x10] sm:$0xff] 0.0
        $region72: #{lm_backbone_orchid_forward.1} parent=63 // pred_fallthru
          _
        %v523 = vld [vmem:[#allocation2] sm:$0xff]
        %v524 = vld [vmem:[#allocation2 + $0x8] sm:$0xff]
        %v525 = vpack.c.bf16 %v524, %v523
        %v526 = vld [vmem:[%s422] sm:$0xff]
        %v527 = vld [vmem:[%s422 + $0x8] sm:$0xf]
        %v528 = vld [vmem:[%s422 + $0xc] sm:$0xff]
        %v529 = vld [vmem:[%s422 + $0x14] sm:$0xf]
        %v530 = vld [vmem:[%s422 + $0x18] sm:$0xff]
        %v531 = vld [vmem:[%s422 + $0x20] sm:$0xf]
        %v532 = vld [vmem:[%s422 + $0x24] sm:$0xff]
        %v533 = vld [vmem:[%s422 + $0x2c] sm:$0xf]
        %v534 = vld [vmem:[%s422 + $0x30] sm:$0xff]
        %v535 = vld [vmem:[%s422 + $0x38] sm:$0xf]
        %v536 = vld [vmem:[%s422 + $0x3c] sm:$0xff]
        %v537 = vld [vmem:[%s422 + $0x44] sm:$0xf]
        %v538 = vld [vmem:[%s422 + $0x48] sm:$0xff]
        %v539 = vld [vmem:[%s422 + $0x50] sm:$0xf]
        %v540 = vld [vmem:[%s422 + $0x54] sm:$0xff]
        %v541 = vld [vmem:[%s422 + $0x5c] sm:$0xf]
        %v542 = vld [vmem:[%s422 + $0x60] sm:$0xff]
        %v543 = vld [vmem:[%s422 + $0x68] sm:$0xf]
        %v544 = vld [vmem:[%s422 + $0x6c] sm:$0xff]
        %v545 = vld [vmem:[%s422 + $0x74] sm:$0xf]
        %v546 = vld [vmem:[%s422 + $0x78] sm:$0xff]
        %v547 = vld [vmem:[%s422 + $0x80] sm:$0xf]
        %v548 = vld [vmem:[%s422 + $0x84] sm:$0xff]
        %v549 = vld [vmem:[%s422 + $0x8c] sm:$0xf]
        %v550 = vld [vmem:[%s422 + $0x90] sm:$0xff]
        %v551 = vld [vmem:[%s422 + $0x98] sm:$0xf]
        %v552 = vld [vmem:[%s422 + $0x9c] sm:$0xff]
        %v553 = vld [vmem:[%s422 + $0xa4] sm:$0xf]
        %v554 = vld [vmem:[%s422 + $0xa8] sm:$0xff]
        %v555 = vld [vmem:[%s422 + $0xb0] sm:$0xf]
        %v556 = vld [vmem:[%s422 + $0xb4] sm:$0xff]
        %v557 = vld [vmem:[%s422 + $0xbc] sm:$0xf]
        %v558 = vld [vmem:[%s487] sm:$0x7]
        %v560 = vlaneseq
        %v561 = vshrl.u32 %v560, 7
        %v562 = vsub.s32 0, %v561
        %v563 = vrot.slane %v558, %v562
        %v564 = vlaneseq
        %v565 = vshrl.u32 %v564, 7
        %v566 = vsub.s32 1, %v565
        %v567 = vrot.slane %v558, %v566
        %v568 = vlaneseq
        %v569 = vshrl.u32 %v568, 7
        %v570 = vsub.s32 2, %v569
        %v571 = vrot.slane %v558, %v570
        %v607 = vunpack.c.l.b16 %v526
        %v608 = vunpack.c.h.b16 %v526
        %v609 = vunpack.c.l.b16 %v527
        %v610 = vunpack.c.l.b16 %v528
        %v611 = vunpack.c.h.b16 %v528
        %v612 = vunpack.c.l.b16 %v529
        %v613 = vunpack.c.l.b16 %v530
        %v614 = vunpack.c.h.b16 %v530
        %v615 = vunpack.c.l.b16 %v531
        %v616 = vunpack.c.l.b16 %v532
        %v617 = vunpack.c.h.b16 %v532
        %v618 = vunpack.c.l.b16 %v533
        %v619 = vunpack.c.l.b16 %v534
        %v620 = vunpack.c.h.b16 %v534
        %v621 = vunpack.c.l.b16 %v535
        %v622 = vunpack.c.l.b16 %v536
        %v623 = vunpack.c.h.b16 %v536
        %v624 = vunpack.c.l.b16 %v537
        %v625 = vunpack.c.l.b16 %v538
        %v626 = vunpack.c.h.b16 %v538
        %v627 = vunpack.c.l.b16 %v539
        %v628 = vunpack.c.l.b16 %v540
        %v629 = vunpack.c.h.b16 %v540
        %v630 = vunpack.c.l.b16 %v541
        %v631 = vunpack.c.l.b16 %v542
        %v632 = vunpack.c.h.b16 %v542
        %v633 = vunpack.c.l.b16 %v543
        %v634 = vunpack.c.l.b16 %v544
        %v635 = vunpack.c.h.b16 %v544
        %v636 = vunpack.c.l.b16 %v545
        %v637 = vunpack.c.l.b16 %v546
        %v638 = vunpack.c.h.b16 %v546
        %v639 = vunpack.c.l.b16 %v547
        %v640 = vunpack.c.l.b16 %v548
        %v641 = vunpack.c.h.b16 %v548
        %v642 = vunpack.c.l.b16 %v549
        %v643 = vunpack.c.l.b16 %v550
        %v644 = vunpack.c.h.b16 %v550
        %v645 = vunpack.c.l.b16 %v551
        %v646 = vunpack.c.l.b16 %v552
        %v647 = vunpack.c.h.b16 %v552
        %v648 = vunpack.c.l.b16 %v553
        %v649 = vunpack.c.l.b16 %v554
        %v650 = vunpack.c.h.b16 %v554
        %v651 = vunpack.c.l.b16 %v555
        %v652 = vunpack.c.l.b16 %v556
        %v653 = vunpack.c.h.b16 %v556
        %v654 = vunpack.c.l.b16 %v557
        %v655 = vpack.c.b16 %v610, %v607
        %v656 = vpack.c.b16 %v611, %v608
        %v657 = vpack.c.b16 %v612, %v609
        %v658 = vpack.c.b16 %v616, %v613
        %v659 = vpack.c.b16 %v617, %v614
        %v660 = vpack.c.b16 %v618, %v615
        %v661 = vpack.c.b16 %v622, %v619
        %v662 = vpack.c.b16 %v623, %v620
        %v663 = vpack.c.b16 %v624, %v621
        %v664 = vpack.c.b16 %v628, %v625
        %v665 = vpack.c.b16 %v629, %v626
        %v666 = vpack.c.b16 %v630, %v627
        %v667 = vpack.c.b16 %v634, %v631
        %v668 = vpack.c.b16 %v635, %v632
        %v669 = vpack.c.b16 %v636, %v633
        %v670 = vpack.c.b16 %v640, %v637
        %v671 = vpack.c.b16 %v641, %v638
        %v672 = vpack.c.b16 %v642, %v639
        %v673 = vpack.c.b16 %v646, %v643
        %v674 = vpack.c.b16 %v647, %v644
        %v675 = vpack.c.b16 %v648, %v645
        %v676 = vpack.c.b16 %v652, %v649
        %v677 = vpack.c.b16 %v653, %v650
        %v678 = vpack.c.b16 %v654, %v651
        %703 = vmatprep.subr.bf16.mxu0 %v677
        %704 = vmatpush1.bf16.msra.mxu0 %v676
        %705 = vmatprep.subr.bf16.mxu0 %v674
        %706 = vmatpush1.bf16.msra.mxu0 %v673
        %707 = vmatprep.subr.bf16.mxu0 %v671
        %708 = vmatpush1.bf16.msra.mxu0 %v670
        %709 = vmatprep.subr.bf16.mxu0 %v668
        %710 = vmatpush1.bf16.msra.mxu0 %v667
        %711 = vmatprep.subr.bf16.mxu0 %v665
        %712 = vmatpush1.bf16.msra.mxu0 %v664
        %713 = vmatprep.subr.bf16.mxu0 %v662
        %714 = vmatpush1.bf16.msra.mxu0 %v661
        %715 = vmatprep.subr.bf16.mxu0 %v659
        %716 = vmatpush1.bf16.msra.mxu0 %v658
        %717 = vmatprep.subr.bf16.mxu0 %v656
        %718 = vmatpush1.bf16.msra.mxu0 %v655
        %719 = vmatprep.subr.bf16.mxu0 0
        %720 = vmatpush2.bf16.msra.mxu0 0
        %721 = vmatprep.subr.bf16.mxu0 0
        %722 = vmatpush2.bf16.msra.mxu0 0
        %723 = vmatprep.subr.bf16.mxu0 0
        %724 = vmatpush2.bf16.msra.mxu0 0
        %725 = vmatprep.subr.bf16.mxu0 0
        %726 = vmatpush2.bf16.msra.mxu0 0
        %727 = vmatprep.subr.bf16.mxu0 0
        %728 = vmatpush2.bf16.msra.mxu0 0
        %729 = vmatprep.subr.bf16.mxu0 0
        %730 = vmatpush2.bf16.msra.mxu0 0
        %731 = vmatprep.subr.bf16.mxu0 0
        %732 = vmatpush2.bf16.msra.mxu0 0
        %733 = vmatprep.subr.bf16.mxu0 0
        %734 = vmatpush2.bf16.msra.mxu0 0
        %735 = vmatprep.mubr.bf16.mxu0 0
        %736 = vmatmul.mubr.bf16.gmra.mxu0 %v525
        %v737 = vpop.f32.mrf.mxu0
        %v738 = vadd.f32 %v563, %v737
        %v739 = vpop.f32.mrf.mxu0
        %v740 = vadd.f32 %v567, %v739
        %v741 = vpop.f32.mrf.mxu0
        %v742 = vadd.f32 %v563, %v741
        %v743 = vpop.f32.mrf.mxu0
        %v744 = vadd.f32 %v567, %v743
        %745 = vdwg.mxu0
        %746 = vmatprep.subr.bf16.mxu0 0
        %747 = vmatpush1.bf16.msra.mxu0 %v678
        %748 = vmatprep.subr.bf16.mxu0 0
        %749 = vmatpush1.bf16.msra.mxu0 %v675
        %750 = vmatprep.subr.bf16.mxu0 0
        %751 = vmatpush1.bf16.msra.mxu0 %v672
        %752 = vmatprep.subr.bf16.mxu0 0
        %753 = vmatpush1.bf16.msra.mxu0 %v669
        %754 = vmatprep.subr.bf16.mxu0 0
        %755 = vmatpush1.bf16.msra.mxu0 %v666
        %756 = vmatprep.subr.bf16.mxu0 0
        %757 = vmatpush1.bf16.msra.mxu0 %v663
        %758 = vmatprep.subr.bf16.mxu0 0
        %759 = vmatpush1.bf16.msra.mxu0 %v660
        %760 = vmatprep.subr.bf16.mxu0 0
        %761 = vmatpush1.bf16.msra.mxu0 %v657
        %762 = vmatprep.subr.bf16.mxu0 0
        %763 = vmatpush2.bf16.msra.mxu0 0
        %764 = vmatprep.subr.bf16.mxu0 0
        %765 = vmatpush2.bf16.msra.mxu0 0
        %766 = vmatprep.subr.bf16.mxu0 0
        %767 = vmatpush2.bf16.msra.mxu0 0
        %768 = vmatprep.subr.bf16.mxu0 0
        %769 = vmatpush2.bf16.msra.mxu0 0
        %770 = vmatprep.subr.bf16.mxu0 0
        %771 = vmatpush2.bf16.msra.mxu0 0
        %772 = vmatprep.subr.bf16.mxu0 0
        %773 = vmatpush2.bf16.msra.mxu0 0
        %774 = vmatprep.subr.bf16.mxu0 0
        %775 = vmatpush2.bf16.msra.mxu0 0
        %776 = vmatprep.subr.bf16.mxu0 0
        %777 = vmatpush2.bf16.msra.mxu0 0
        %778 = vmatprep.mubr.bf16.mxu0 0
        %779 = vmatmul.mubr.bf16.gmra.mxu0 %v525
        %v780 = vpop.f32.mrf.mxu0
        %v781 = vadd.f32 %v571, %v780
        %v782 = vpop.f32.mrf.mxu0
        %v783 = vpop.f32.mrf.mxu0
        %v784 = vadd.f32 %v571, %v783
        %v785 = vpop.f32.mrf.mxu0
        %786 = vdwg.mxu0
        %v787 = vld [vmem:[%s492] sm:$0x7]
        %v788 = vld [vmem:[%s492 + $0x4] sm:$0x7]
        %v789 = vld [vmem:[%s492 + $0x8] sm:$0x7]
        %v790 = vld [vmem:[%s496] sm:$0x1]
        %v791 = vld [vmem:[%s496 + $0x1] sm:$0x1]
        %v792 = vld [vmem:[%s496 + $0x2] sm:$0x1]
        %793 = vst [vmem:[#allocation3 + $0x8] sm:$0xff] %v738
        %794 = vst [vmem:[#allocation3 + $0x18] sm:$0xff] %v742
        %v795 = vld [vmem:[#allocation3 + $0x6] sm:$0xff]
        %v796 = vld [vmem:[#allocation3 + $0x16] sm:$0xff]
        %v797 = vlaneseq
        %v798 = vshrl.u32 %v797, 7
        %v799 = vsub.s32 0, %v798
        %v800 = vrot.slane %v787, %v799
        %v801 = vmul.f32 %v795, %v800
        %v802 = vmul.f32 %v796, %v800
        %v803 = vld [vmem:[#allocation3 + $0x7] sm:$0xff]
        %v804 = vld [vmem:[#allocation3 + $0x17] sm:$0xff]
        %v805 = vlaneseq
        %v806 = vshrl.u32 %v805, 7
        %v807 = vsub.s32 1, %v806
        %v808 = vrot.slane %v787, %v807
        %v809 = vmul.f32 %v803, %v808
        %v810 = vmul.f32 %v804, %v808
        %v811 = vadd.f32 %v801, %v809
        %v812 = vadd.f32 %v802, %v810
        %v813 = vlaneseq
        %v814 = vshrl.u32 %v813, 7
        %v815 = vsub.s32 2, %v814
        %v816 = vrot.slane %v787, %v815
        %v817 = vmul.f32 %v738, %v816
        %v818 = vmul.f32 %v742, %v816
        %v819 = vadd.f32 %v811, %v817
        %v820 = vadd.f32 %v812, %v818
        %v822 = vlaneseq
        %v823 = vshrl.u32 %v822, 7
        %v824 = vsub.s32 0, %v823
        %v825 = vrot.slane %v790, %v824
        %v827 = vadd.f32 %v819, %v825
        %v828 = vadd.f32 %v820, %v825
        %829 = vst [vmem:[#allocation3 + $0x8] sm:$0xff] %v740
        %830 = vst [vmem:[#allocation3 + $0x18] sm:$0xff] %v744
        %v831 = vld [vmem:[#allocation3 + $0x6] sm:$0xff]
        %v832 = vld [vmem:[#allocation3 + $0x16] sm:$0xff]
        %v833 = vlaneseq
        %v834 = vshrl.u32 %v833, 7
        %v835 = vsub.s32 0, %v834
        %v836 = vrot.slane %v788, %v835
        %v837 = vmul.f32 %v831, %v836
        %v838 = vmul.f32 %v832, %v836
        %v839 = vld [vmem:[#allocation3 + $0x7] sm:$0xff]
        %v840 = vld [vmem:[#allocation3 + $0x17] sm:$0xff]
        %v841 = vlaneseq
        %v842 = vshrl.u32 %v841, 7
        %v843 = vsub.s32 1, %v842
        %v844 = vrot.slane %v788, %v843
        %v845 = vmul.f32 %v839, %v844
        %v846 = vmul.f32 %v840, %v844
        %v847 = vadd.f32 %v837, %v845
        %v848 = vadd.f32 %v838, %v846
        %v849 = vlaneseq
        %v850 = vshrl.u32 %v849, 7
        %v851 = vsub.s32 2, %v850
        %v852 = vrot.slane %v788, %v851
        %v853 = vmul.f32 %v740, %v852
        %v854 = vmul.f32 %v744, %v852
        %v855 = vadd.f32 %v847, %v853
        %v856 = vadd.f32 %v848, %v854
        %v858 = vlaneseq
        %v859 = vshrl.u32 %v858, 7
        %v860 = vsub.s32 0, %v859
        %v861 = vrot.slane %v791, %v860
        %v863 = vadd.f32 %v855, %v861
        %v864 = vadd.f32 %v856, %v861
        %865 = vst [vmem:[#allocation3 + $0x8] sm:$0xff] %v781
        %866 = vst [vmem:[#allocation3 + $0x18] sm:$0xff] %v784
        %v867 = vld [vmem:[#allocation3 + $0x6] sm:$0xff]
        %v868 = vld [vmem:[#allocation3 + $0x16] sm:$0xff]
        %v869 = vlaneseq
        %v870 = vshrl.u32 %v869, 7
        %v871 = vsub.s32 0, %v870
        %v872 = vrot.slane %v789, %v871
        %v873 = vmul.f32 %v867, %v872
        %v874 = vmul.f32 %v868, %v872
        %v875 = vld [vmem:[#allocation3 + $0x7] sm:$0xff]
        %v876 = vld [vmem:[#allocation3 + $0x17] sm:$0xff]
        %v877 = vlaneseq
        %v878 = vshrl.u32 %v877, 7
        %v879 = vsub.s32 1, %v878
        %v880 = vrot.slane %v789, %v879
        %v881 = vmul.f32 %v875, %v880
        %v882 = vmul.f32 %v876, %v880
        %v883 = vadd.f32 %v873, %v881
        %v884 = vadd.f32 %v874, %v882
        %v885 = vlaneseq
        %v886 = vshrl.u32 %v885, 7
        %v887 = vsub.s32 2, %v886
        %v888 = vrot.slane %v789, %v887
        %v889 = vmul.f32 %v781, %v888
        %v890 = vmul.f32 %v784, %v888
        %v891 = vadd.f32 %v883, %v889
        %v892 = vadd.f32 %v884, %v890
        %v894 = vlaneseq
        %v895 = vshrl.u32 %v894, 7
        %v896 = vsub.s32 0, %v895
        %v897 = vrot.slane %v792, %v896
        %v899 = vadd.f32 %v891, %v897
        %v900 = vadd.f32 %v892, %v897
        %v901 = vmul.f32 %v899, %v863
        %v902 = vmul.f32 %v900, %v864
        %903 = vst [vmem:[#allocation3 + $0x8] sm:$0xff] %v901
        %904 = vst [vmem:[#allocation3 + $0x18] sm:$0xff] %v902
        %v905 = vld [vmem:[%s503] sm:$0x1]
        %v907 = vlaneseq
        %v908 = vshrl.u32 %v907, 7
        %v909 = vsub.s32 0, %v908
        %v910 = vrot.slane %v905, %v909
        %v912 = vmul.f32 %v901, %v910
        %v913 = vmul.f32 %v902, %v910
        %v914 = vld [vmem:[%s500] sm:$0x1]
        %v915 = vld [vmem:[#allocation3 + $0x8] sm:$0xff]
        %v916 = vld [vmem:[#allocation3 + $0x18] sm:$0xff]
        %v917 = vlaneseq
        %v918 = vshrl.u32 %v917, 7
        %v919 = vsub.s32 0, %v918
        %v920 = vrot.slane %v914, %v919
        %v921 = vmul.f32 %v920, %v915
        %v922 = vmul.f32 %v920, %v916
        %v923 = vadd.f32 %v912, %v921
        %v924 = vadd.f32 %v913, %v922
        %v925 = vld [vmem:[%s500 + $0x1] sm:$0x1]
        %v926 = vld [vmem:[#allocation3 + $0x7] sm:$0xff]
        %v927 = vld [vmem:[#allocation3 + $0x17] sm:$0xff]
        %v928 = vlaneseq
        %v929 = vshrl.u32 %v928, 7
        %v930 = vsub.s32 0, %v929
        %v931 = vrot.slane %v925, %v930
        %v932 = vmul.f32 %v931, %v926
        %v933 = vmul.f32 %v931, %v927
        %v934 = vadd.f32 %v923, %v932
        %v935 = vadd.f32 %v924, %v933
        %v936 = vld [vmem:[%s500 + $0x2] sm:$0x1]
        %v937 = vld [vmem:[#allocation3 + $0x6] sm:$0xff]
        %v938 = vld [vmem:[#allocation3 + $0x16] sm:$0xff]
        %v939 = vlaneseq
        %v940 = vshrl.u32 %v939, 7
        %v941 = vsub.s32 0, %v940
        %v942 = vrot.slane %v936, %v941
        %v943 = vmul.f32 %v942, %v937
        %v944 = vmul.f32 %v942, %v938
        %v945 = vadd.f32 %v934, %v943
        %v946 = vadd.f32 %v935, %v944
        %v947 = vld [vmem:[%s500 + $0x3] sm:$0x1]
        %v948 = vld [vmem:[#allocation3 + $0x5] sm:$0xff]
        %v949 = vld [vmem:[#allocation3 + $0x15] sm:$0xff]
        %v950 = vlaneseq
        %v951 = vshrl.u32 %v950, 7
        %v952 = vsub.s32 0, %v951
        %v953 = vrot.slane %v947, %v952
        %v954 = vmul.f32 %v953, %v948
        %v955 = vmul.f32 %v953, %v949
        %v956 = vadd.f32 %v945, %v954
        %v957 = vadd.f32 %v946, %v955
        %v958 = vld [vmem:[%s500 + $0x4] sm:$0x1]
        %v959 = vld [vmem:[#allocation3 + $0x4] sm:$0xff]
        %v960 = vld [vmem:[#allocation3 + $0x14] sm:$0xff]
        %v961 = vlaneseq
        %v962 = vshrl.u32 %v961, 7
        %v963 = vsub.s32 0, %v962
        %v964 = vrot.slane %v958, %v963
        %v965 = vmul.f32 %v964, %v959
        %v966 = vmul.f32 %v964, %v960
        %v967 = vadd.f32 %v956, %v965
        %v968 = vadd.f32 %v957, %v966
        %v969 = vld [vmem:[%s500 + $0x5] sm:$0x1]
        %v970 = vld [vmem:[#allocation3 + $0x3] sm:$0xff]
        %v971 = vld [vmem:[#allocation3 + $0x13] sm:$0xff]
        %v972 = vlaneseq
        %v973 = vshrl.u32 %v972, 7
        %v974 = vsub.s32 0, %v973
        %v975 = vrot.slane %v969, %v974
        %v976 = vmul.f32 %v975, %v970
        %v977 = vmul.f32 %v975, %v971
        %v978 = vadd.f32 %v967, %v976
        %v979 = vadd.f32 %v968, %v977
        %v980 = vld [vmem:[%s500 + $0x6] sm:$0x1]
        %v981 = vld [vmem:[#allocation3 + $0x2] sm:$0xff]
        %v982 = vld [vmem:[#allocation3 + $0x12] sm:$0xff]
        %v983 = vlaneseq
        %v984 = vshrl.u32 %v983, 7
        %v985 = vsub.s32 0, %v984
        %v986 = vrot.slane %v980, %v985
        %v987 = vmul.f32 %v986, %v981
        %v988 = vmul.f32 %v986, %v982
        %v989 = vadd.f32 %v978, %v987
        %v990 = vadd.f32 %v979, %v988
        %v991 = vld [vmem:[%s500 + $0x7] sm:$0x1]
        %v992 = vld [vmem:[#allocation3 + $0x1] sm:$0xff]
        %v993 = vld [vmem:[#allocation3 + $0x11] sm:$0xff]
        %v994 = vlaneseq
        %v995 = vshrl.u32 %v994, 7
        %v996 = vsub.s32 0, %v995
        %v997 = vrot.slane %v991, %v996
        %v998 = vmul.f32 %v997, %v992
        %v999 = vmul.f32 %v997, %v993
        %v1000 = vadd.f32 %v989, %v998
        %v1001 = vadd.f32 %v990, %v999
        %v1002 = vmul.f32 %v1000, %v827
        %v1003 = vmul.f32 %v1001, %v828
        %v1004 = vpack.c.bf16 %v1003, %v1002
        %v1005 = vld [vmem:[%s508] sm:$0xf]
        %v1006 = vld [vmem:[%s508 + $0x4] sm:$0xf]
        %v1007 = vld [vmem:[%s508 + $0x8] sm:$0xf]
        %v1008 = vld [vmem:[%s508 + $0xc] sm:$0xf]
        %v1009 = vld [vmem:[%s508 + $0x10] sm:$0xf]
        %v1010 = vld [vmem:[%s508 + $0x14] sm:$0xf]
        %v1011 = vld [vmem:[%s508 + $0x18] sm:$0xf]
        %v1012 = vld [vmem:[%s508 + $0x1c] sm:$0xf]
        %v1013 = vld [vmem:[%s508 + $0x20] sm:$0xf]
        %v1014 = vld [vmem:[%s508 + $0x24] sm:$0xf]
        %v1015 = vld [vmem:[%s508 + $0x28] sm:$0xf]
        %v1016 = vld [vmem:[%s508 + $0x2c] sm:$0xf]
        %v1017 = vld [vmem:[%s508 + $0x30] sm:$0xf]
        %v1018 = vld [vmem:[%s508 + $0x34] sm:$0xf]
        %v1019 = vld [vmem:[%s508 + $0x38] sm:$0xf]
        %v1020 = vld [vmem:[%s508 + $0x3c] sm:$0xf]
        %v1021 = vld [vmem:[%s511] sm:$0x1]
        %v1023 = vlaneseq
        %v1024 = vshrl.u32 %v1023, 7
        %v1025 = vsub.s32 0, %v1024
        %v1026 = vrot.slane %v1021, %v1025
        %v1044 = vunpack.c.l.b16 %v1005
        %v1045 = vunpack.c.l.b16 %v1006
        %v1046 = vunpack.c.l.b16 %v1007
        %v1047 = vunpack.c.l.b16 %v1008
        %v1048 = vunpack.c.l.b16 %v1009
        %v1049 = vunpack.c.l.b16 %v1010
        %v1050 = vunpack.c.l.b16 %v1011
        %v1051 = vunpack.c.l.b16 %v1012
        %v1052 = vunpack.c.l.b16 %v1013
        %v1053 = vunpack.c.l.b16 %v1014
        %v1054 = vunpack.c.l.b16 %v1015
        %v1055 = vunpack.c.l.b16 %v1016
        %v1056 = vunpack.c.l.b16 %v1017
        %v1057 = vunpack.c.l.b16 %v1018
        %v1058 = vunpack.c.l.b16 %v1019
        %v1059 = vunpack.c.l.b16 %v1020
        %v1060 = vpack.c.b16 %v1045, %v1044
        %v1061 = vpack.c.b16 %v1047, %v1046
        %v1062 = vpack.c.b16 %v1049, %v1048
        %v1063 = vpack.c.b16 %v1051, %v1050
        %v1064 = vpack.c.b16 %v1053, %v1052
        %v1065 = vpack.c.b16 %v1055, %v1054
        %v1066 = vpack.c.b16 %v1057, %v1056
        %v1067 = vpack.c.b16 %v1059, %v1058
        %1076 = vmatprep.subr.bf16.mxu0 0
        %1077 = vmatpush1.bf16.msra.mxu0 %v1067
        %1078 = vmatprep.subr.bf16.mxu0 0
        %1079 = vmatpush1.bf16.msra.mxu0 %v1066
        %1080 = vmatprep.subr.bf16.mxu0 0
        %1081 = vmatpush1.bf16.msra.mxu0 %v1065
        %1082 = vmatprep.subr.bf16.mxu0 0
        %1083 = vmatpush1.bf16.msra.mxu0 %v1064
        %1084 = vmatprep.subr.bf16.mxu0 0
        %1085 = vmatpush1.bf16.msra.mxu0 %v1063
        %1086 = vmatprep.subr.bf16.mxu0 0
        %1087 = vmatpush1.bf16.msra.mxu0 %v1062
        %1088 = vmatprep.subr.bf16.mxu0 0
        %1089 = vmatpush1.bf16.msra.mxu0 %v1061
        %1090 = vmatprep.subr.bf16.mxu0 0
        %1091 = vmatpush1.bf16.msra.mxu0 %v1060
        %1092 = vmatprep.subr.bf16.mxu0 0
        %1093 = vmatpush2.bf16.msra.mxu0 0
        %1094 = vmatprep.subr.bf16.mxu0 0
        %1095 = vmatpush2.bf16.msra.mxu0 0
        %1096 = vmatprep.subr.bf16.mxu0 0
        %1097 = vmatpush2.bf16.msra.mxu0 0
        %1098 = vmatprep.subr.bf16.mxu0 0
        %1099 = vmatpush2.bf16.msra.mxu0 0
        %1100 = vmatprep.subr.bf16.mxu0 0
        %1101 = vmatpush2.bf16.msra.mxu0 0
        %1102 = vmatprep.subr.bf16.mxu0 0
        %1103 = vmatpush2.bf16.msra.mxu0 0
        %1104 = vmatprep.subr.bf16.mxu0 0
        %1105 = vmatpush2.bf16.msra.mxu0 0
        %1106 = vmatprep.subr.bf16.mxu0 0
        %1107 = vmatpush2.bf16.msra.mxu0 0
        %1108 = vmatprep.mubr.bf16.mxu0 0
        %1109 = vmatmul.mubr.bf16.gmra.mxu0 %v1004
        %v1110 = vpop.f32.mrf.mxu0
        %v1111 = vadd.f32 %v1026, %v1110
        %v1112 = vpop.f32.mrf.mxu0
        %v1113 = vpop.f32.mrf.mxu0
        %v1114 = vadd.f32 %v1026, %v1113
        %v1115 = vpop.f32.mrf.mxu0
        %1116 = vdwg.mxu0
        %1117 = vst [vmem:[#allocation2] sm:$0xff] %v1111
        %1118 = vst [vmem:[#allocation2 + $0x8] sm:$0xff] %v1114
        %p1119 = scmp.eq.s32.totalorder %s26, 1
        // Predicated region
        $region73: #{lm_backbone_orchid_forward.1} parent=63 // pred_check
          %p1120 = pneg %p1119
        $region74: #{lm_backbone_orchid_forward.1} parent=63 // pred_check_branch
          %1122 = sbr.rel (%p1120) target = $region76
        $region75: #{lm_backbone_orchid_forward.1} parent=63 // pred_region
          %1123 = vadd.xlane.f32.xlu0 %v1111
          %v1124 = vpop.xlane.xlu0 %1123
          %1125 = vadd.xlane.f32.xlu0 %v1114
          %v1126 = vpop.xlane.xlu0 %1125
          %v1127 = vrcp.pop 128.0
          %v1128 = vmul.f32 %v1124, %v1127
          %v1129 = vmul.f32 %v1126, %v1127
          %v1130 = vsub.f32 %v1111, %v1128
          %v1131 = vsub.f32 %v1114, %v1129
          %v1132 = vmul.f32 %v1130, %v1130
          %v1133 = vmul.f32 %v1131, %v1131
          %1134 = vadd.xlane.f32.xlu0 %v1132
          %v1135 = vpop.xlane.xlu0 %1134
          %1136 = vadd.xlane.f32.xlu0 %v1133
          %v1137 = vpop.xlane.xlu0 %1136
          %v1138 = vmul.f32 %v1135, %v1127
          %v1139 = vmul.f32 %v1137, %v1127
          %v1140 = vadd.f32 %v1138, 1e-05
          %v1141 = vadd.f32 %v1139, 1e-05
          %v1142 = vrsqrt.pop %v1140
          %v1143 = vrsqrt.pop %v1141
          %v1144 = vmul.f32 %v1130, %v1142
          %v1145 = vmul.f32 %v1131, %v1143
          %v1146 = vld [vmem:[%s9] sm:$0x1]
          %v1148 = vlaneseq
          %v1149 = vshrl.u32 %v1148, 7
          %v1150 = vsub.s32 0, %v1149
          %v1151 = vrot.slane %v1146, %v1150
          %v1153 = vmul.f32 %v1144, %v1151
          %v1154 = vmul.f32 %v1145, %v1151
          %v1155 = vld [vmem:[%s10] sm:$0x1]
          %v1157 = vlaneseq
          %v1158 = vshrl.u32 %v1157, 7
          %v1159 = vsub.s32 0, %v1158
          %v1160 = vrot.slane %v1155, %v1159
          %v1162 = vadd.f32 %v1153, %v1160
          %v1163 = vadd.f32 %v1154, %v1160
          %1164 = vst [vmem:[#allocation7] sm:$0xff] %v1162
          %1165 = vst [vmem:[#allocation7 + $0x8] sm:$0xff] %v1163
        $region76: #{lm_backbone_orchid_forward.1} parent=63 // pred_fallthru
          _
        // Predicated region
        $region77: #{lm_backbone_orchid_forward.1} parent=63 // pred_check
          %p1166 = pneg %p310
        $region78: #{lm_backbone_orchid_forward.1} parent=63 // pred_check_branch
          %1168 = sbr.rel (%p1166) target = $region80
        $region79: #{lm_backbone_orchid_forward.1} parent=63 // pred_region
          %s1170 = ssub.s32 256, 256
          %1171 = vsyncadd [#allocation6], %s1170
          %s1172 = sshll.u32 [#allocation7], 4
          %s1173 = int_to_ptr.vmem [resolvable:$true] %s1172
          %1178 = dma.vmem_to_hbm [thread:$0]  %s1173, 256, %s11, [#allocation6], 128, 128, 8
        $region80: #{lm_backbone_orchid_forward.1} parent=63 // pred_fallthru
          _
        // Predicated region
        $region81: #{lm_backbone_orchid_forward.1} parent=63 // pred_check
          %p1179 = pneg %p310
        $region82: #{lm_backbone_orchid_forward.1} parent=63 // pred_check_branch
          %1181 = sbr.rel (%p1179) target = $region84
        $region83: #{lm_backbone_orchid_forward.1} parent=63 // pred_region
          %1182 = dma.done [#allocation6], 256
        $region84: #{lm_backbone_orchid_forward.1} parent=63 // pred_fallthru
          _
      $region64: #{lm_backbone_orchid_forward.1} parent=5 // pred_fallthru
        _
      %p1183 = scmp.le.s32.totalorder 2, %s21
      // Predicated region
      $region85: #{lm_backbone_orchid_forward.1} parent=5 // pred_check
        %p1184 = pneg %p1183
      $region86: #{lm_backbone_orchid_forward.1} parent=5 // pred_check_branch
        %1186 = sbr.rel (%p1184) target = $region88
      $region87: #{lm_backbone_orchid_forward.1} parent=5 // pred_region
        %s1187 = ssub.s32 %s21, 2
      $region88: #{lm_backbone_orchid_forward.1} parent=5 // pred_fallthru
        _
    $region6: #{lm_backbone_orchid_forward.1} parent=1 // loop_footer
      %s25 = sadd.s32 1, %s21
    $region7: #{lm_backbone_orchid_forward.1} parent=1 // loop_footer_branch
      %20 = sbr.rel target = $region3
    $region8: #{lm_backbone_orchid_forward.1} parent=1 // loop_exit
      _
    %1188 = vsyncpa [#allocation5], 1
    %s1189 = scalar_lea.sflag [#allocation5], 1
    %1190 = vsyncpa %s1189, 1
    %1191 = vsyncpa [#allocation6], 1
    %s1192 = scalar_lea.sflag [#allocation6], 1
    %1193 = vsyncpa %s1192, 1

</llo_original>
